<compile_context>
chip_gen: v7x
topology: tpu7x:2x2x1
jax: 0.10.0
libtpu: 0.0.40
codegen_flags: <defaults>
</compile_context>

<pallas_src>
import functools

import jax
import jax.numpy as jnp
import numpy as np
from jax.experimental import pallas as pl
from jax.experimental.pallas import tpu as pltpu

LANE = 128
SUBLANE = 8


def _lstm_kernel(x_ref, wih_ref, whh_ref, b_ref, fcw_ref, fcb_ref,
                 out_ref, pg_sc, *, T, Bp, Hp):
    # ---- Hoisted input projection: all timesteps in one MXU matmul. ----
    # x_ref: (T*Bp, E) bf16, wih_ref: (E, 4*Hp) bf16 -> pre-gates (T*Bp, 4*Hp) f32
    pg_sc[...] = (jnp.dot(x_ref[...], wih_ref[...],
                          preferred_element_type=jnp.float32)
                  + b_ref[...])

    h0 = jnp.zeros((Bp, Hp), jnp.float32)
    c0 = jnp.zeros((Bp, Hp), jnp.float32)

    def step(t, carry):
        h_prev, c_prev = carry
        # Serial part of the recurrence: only h @ W_hh (bf16 operands, f32 acc).
        gates = (pg_sc[pl.ds(t * Bp, Bp), :]
                 + jnp.dot(h_prev.astype(whh_ref.dtype), whh_ref[...],
                           preferred_element_type=jnp.float32))
        # PyTorch gate order: i, f, g, o. Hp is a multiple of 128 so each
        # slice covers whole 128-lane vregs (no mid-vreg relayouts).
        i_g = jax.nn.sigmoid(gates[:, 0 * Hp:1 * Hp])
        f_g = jax.nn.sigmoid(gates[:, 1 * Hp:2 * Hp])
        g_g = jnp.tanh(gates[:, 2 * Hp:3 * Hp])
        o_g = jax.nn.sigmoid(gates[:, 3 * Hp:4 * Hp])
        c_new = f_g * c_prev + i_g * g_g
        h_new = o_g * jnp.tanh(c_new)
        return h_new, c_new

    # Short, statically-bounded recurrence: fully unrolled so h/c stay in vregs.
    h_last, _ = jax.lax.fori_loop(0, T, step, (h0, c0), unroll=True)

    # ---- FC head: Linear(H -> 1) + sigmoid. Lane-dense padded output. ----
    logit = (jnp.dot(h_last, fcw_ref[...], preferred_element_type=jnp.float32)
             + fcb_ref[0, 0])
    out_ref[...] = jax.nn.sigmoid(logit)


def _pack_params(params, Hp):
    """Pad/transpose logical params into lane-aligned kernel layouts."""
    H = params["w_hh"].shape[0]

    def pad_gate_cols(w):
        # (rows, 4*H) -> (rows, 4*Hp): zero-pad each gate's columns to Hp lanes.
        rows = w.shape[0]
        w4 = w.reshape(rows, 4, H)
        out = jnp.zeros((rows, 4, Hp), w.dtype).at[:, :, :H].set(w4)
        return out.reshape(rows, 4 * Hp)

    w_ih_p = pad_gate_cols(params["w_ih"]).astype(jnp.bfloat16)            # (E, 4Hp)
    w_hh_p = jnp.zeros((Hp, 4 * Hp), jnp.float32)
    w_hh_p = w_hh_p.at[:H, :].set(pad_gate_cols(params["w_hh"]))
    w_hh_p = w_hh_p.astype(jnp.bfloat16)                                   # (Hp, 4Hp)
    b_p = pad_gate_cols(params["b"]).astype(jnp.float32)                   # (1, 4Hp)
    fc_w_p = jnp.zeros((Hp, LANE), jnp.float32).at[:H, 0:1].set(params["fc_w"])
    return w_ih_p, w_hh_p, b_p, fc_w_p


def lstm_model_forward(x_tokens, params):
    """x_tokens: int32 (B, T) token ids. Returns (B, 1) float32 probabilities."""
    emb = params["embedding"]          # (V, E)
    E = emb.shape[1]
    H = params["w_hh"].shape[0]
    B, T = x_tokens.shape

    Hp = ((H + LANE - 1) // LANE) * LANE                       # 64 -> 128
    Bp = max(SUBLANE, ((B + SUBLANE - 1) // SUBLANE) * SUBLANE)  # 2 -> 8

    w_ih_p, w_hh_p, b_p, fc_w_p = _pack_params(params, Hp)
    fc_b = params["fc_b"].reshape(1, 1).astype(jnp.float32)

    # Embedding lookup (plain-JAX glue) gathered directly in time-major order,
    # batch padded to a sublane multiple, flattened to (T*Bp, E) so the kernel
    # can do the whole input projection as one matmul.
    x_emb = emb[x_tokens.T].astype(jnp.float32)                 # (T, B, E)
    x_emb = jnp.pad(x_emb, ((0, 0), (0, Bp - B), (0, 0)))       # (T, Bp, E)
    x_emb = x_emb.reshape(T * Bp, E).astype(jnp.bfloat16)       # (T*Bp, E)

    kernel = functools.partial(_lstm_kernel, T=T, Bp=Bp, Hp=Hp)

    out = pl.pallas_call(
        kernel,
        out_shape=jax.ShapeDtypeStruct((Bp, LANE), jnp.float32),
        in_specs=[
            pl.BlockSpec(memory_space=pltpu.MemorySpace.VMEM),   # x_emb (T*Bp, E)
            pl.BlockSpec(memory_space=pltpu.MemorySpace.VMEM),   # W_ih (E, 4Hp)
            pl.BlockSpec(memory_space=pltpu.MemorySpace.VMEM),   # W_hh (Hp, 4Hp)
            pl.BlockSpec(memory_space=pltpu.MemorySpace.VMEM),   # b    (1, 4Hp)
            pl.BlockSpec(memory_space=pltpu.MemorySpace.VMEM),   # fc_w (Hp, LANE)
            pl.BlockSpec(memory_space=pltpu.MemorySpace.SMEM),   # fc_b (1, 1)
        ],
        out_specs=pl.BlockSpec(memory_space=pltpu.MemorySpace.VMEM),
        scratch_shapes=[
            pltpu.VMEM((T * Bp, 4 * Hp), jnp.float32),           # pre-gates
        ],
        compiler_params=pltpu.CompilerParams(vmem_limit_bytes=64 * 1024 * 1024),
    )(x_emb, w_ih_p, w_hh_p, b_p, fc_w_p, fc_b)

    return out[:B, 0:1]


def lstm_model_reference(x_tokens, params):
    """Pure-JAX f32 reference with PyTorch LSTM semantics (for validation)."""
    emb = params["embedding"]
    H = params["w_hh"].shape[0]
    x = emb[x_tokens].astype(jnp.float32)          # (B, T, E)
    B = x.shape[0]

    def step(carry, x_t):
        h, c = carry
        gates = x_t @ params["w_ih"] + h @ params["w_hh"] + params["b"]
        i = jax.nn.sigmoid(gates[:, 0 * H:1 * H])
        f = jax.nn.sigmoid(gates[:, 1 * H:2 * H])
        g = jnp.tanh(gates[:, 2 * H:3 * H])
        o = jax.nn.sigmoid(gates[:, 3 * H:4 * H])
        c = f * c + i * g
        h = o * jnp.tanh(c)
        return (h, c), None

    init = (jnp.zeros((B, H), jnp.float32), jnp.zeros((B, H), jnp.float32))
    (h_last, _), _ = jax.lax.scan(step, init, jnp.swapaxes(x, 0, 1))
    return jax.nn.sigmoid(h_last @ params["fc_w"] + params["fc_b"])


def init_params(key, vocab_size, embedding_dim, hidden_dim):
    k = jax.random.split(key, 7)
    E, H, V = embedding_dim, hidden_dim, vocab_size
    scale = 1.0 / jnp.sqrt(H)
    params = {
        "embedding": jax.random.normal(k[0], (V, E), jnp.float32),
        # PyTorch stores W_ih as (4H, E); we keep the transposed (E, 4H) layout.
        "w_ih": jax.random.uniform(k[1], (E, 4 * H), jnp.float32, -1.0, 1.0) * scale,
        "w_hh": jax.random.uniform(k[2], (H, 4 * H), jnp.float32, -1.0, 1.0) * scale,
        "b": (jax.random.uniform(k[3], (1, 4 * H), jnp.float32, -1.0, 1.0) * scale
              + jax.random.uniform(k[4], (1, 4 * H), jnp.float32, -1.0, 1.0) * scale),
        "fc_w": jax.random.uniform(k[5], (H, 1), jnp.float32, -1.0, 1.0) * scale,
        "fc_b": jax.random.uniform(k[6], (1, 1), jnp.float32, -1.0, 1.0) * scale,
    }
    return params


if __name__ == "__main__":
    vocab_size = 50
    embedding_dim = 128
    hidden_dim = 64
    B, T = 2, 8

    key = jax.random.PRNGKey(0)
    pkey, xkey = jax.random.split(key)
    params = init_params(pkey, vocab_size, embedding_dim, hidden_dim)
    x_tokens = jax.random.randint(xkey, (B, T), 0, vocab_size, dtype=jnp.int32)

    out = jax.jit(lstm_model_forward)(x_tokens, params)
    jax.block_until_ready(out)
    assert out.shape == (B, 1)

    ref = lstm_model_reference(x_tokens, params)
    assert np.allclose(np.asarray(out), np.asarray(ref), atol=5e-2), (
        f"kernel vs reference mismatch:\n{np.asarray(out)}\n{np.asarray(ref)}")

    print("KERNEL_OK")
</pallas_src>

<mosaic_0001>
module attributes {stable_mosaic.version = 11 : i64} {
  func.func @_lstm_kernel(%arg0: memref<64x128xbf16, #tpu.memory_space<vmem>>, %arg1: memref<128x512xbf16, #tpu.memory_space<vmem>>, %arg2: memref<128x512xbf16, #tpu.memory_space<vmem>>, %arg3: memref<1x512xf32, #tpu.memory_space<vmem>>, %arg4: memref<128x128xf32, #tpu.memory_space<vmem>>, %arg5: memref<1x1xf32, #tpu.memory_space<smem>>, %arg6: memref<8x128xf32, #tpu.memory_space<vmem>>, %arg7: memref<64x512xf32, #tpu.memory_space<vmem>>) attributes {dimension_semantics = [], scalar_prefetch = 0 : i64, scratch_operands = 1 : i64, tpu.core_type = #tpu.core_type<tc>} {
    %c0 = arith.constant 0 : index
    %c0_0 = arith.constant 0 : index
    %0 = vector.load %arg0[%c0, %c0_0] : memref<64x128xbf16, #tpu.memory_space<vmem>>, vector<64x128xbf16>
    %c0_1 = arith.constant 0 : index
    %c0_2 = arith.constant 0 : index
    %1 = vector.load %arg1[%c0_1, %c0_2] : memref<128x512xbf16, #tpu.memory_space<vmem>>, vector<128x512xbf16>
    %cst = arith.constant dense<0.000000e+00> : vector<64x512xf32>
    %2 = tpu.matmul %0, %1, %cst {dimension_numbers = #tpu.dot_dimension_numbers<[1], [0], [0], [1], [0, 0, 1, 1], [], []>} : vector<64x128xbf16>, vector<128x512xbf16>, vector<64x512xf32> -> vector<64x512xf32>
    %c0_3 = arith.constant 0 : index
    %c0_4 = arith.constant 0 : index
    %3 = vector.load %arg3[%c0_3, %c0_4] : memref<1x512xf32, #tpu.memory_space<vmem>>, vector<1x512xf32>
    %4 = vector.broadcast %3 : vector<1x512xf32> to vector<64x512xf32>
    %5 = arith.addf %2, %4 : vector<64x512xf32>
    %c0_5 = arith.constant 0 : index
    %c0_6 = arith.constant 0 : index
    %6 = vector.load %arg7[%c0_5, %c0_6] : memref<64x512xf32, #tpu.memory_space<vmem>>, vector<64x512xf32>
    tpu.vector_store %arg7[%c0_5, %c0_6], %5 {strides = array<i32>} : memref<64x512xf32, #tpu.memory_space<vmem>>, vector<64x512xf32>,
    %cst_7 = arith.constant 0.000000e+00 : f32
    %7 = vector.broadcast %cst_7 : f32 to vector<8x128xf32>
    %cst_8 = arith.constant 0.000000e+00 : f32
    %8 = vector.broadcast %cst_8 : f32 to vector<8x128xf32>
    %c0_i32 = arith.constant 0 : i32
    %c8_i32 = arith.constant 8 : i32
    %9 = arith.muli %c0_i32, %c8_i32 : i32
    %10 = arith.index_cast %9 : i32 to index
    %c0_9 = arith.constant 0 : index
    %11 = vector.load %arg7[%10, %c0_9] : memref<64x512xf32, #tpu.memory_space<vmem>>, vector<8x512xf32>
    %12 = arith.truncf %7 : vector<8x128xf32> to vector<8x128xbf16>
    %c0_10 = arith.constant 0 : index
    %c0_11 = arith.constant 0 : index
    %13 = vector.load %arg2[%c0_10, %c0_11] : memref<128x512xbf16, #tpu.memory_space<vmem>>, vector<128x512xbf16>
    %cst_12 = arith.constant dense<0.000000e+00> : vector<8x512xf32>
    %14 = tpu.matmul %12, %13, %cst_12 {dimension_numbers = #tpu.dot_dimension_numbers<[1], [0], [0], [1], [0, 0, 1, 1], [], []>} : vector<8x128xbf16>, vector<128x512xbf16>, vector<8x512xf32> -> vector<8x512xf32>
    %15 = arith.addf %11, %14 : vector<8x512xf32>
    %16 = vector.extract_strided_slice %15 {offsets = [0, 0], sizes = [8, 128], strides = [1, 1]} : vector<8x512xf32> to vector<8x128xf32>
    %17 = arith.negf %16 : vector<8x128xf32>
    %18 = math.exp %17 : vector<8x128xf32>
    %cst_13 = arith.constant 1.000000e+00 : f32
    %19 = vector.broadcast %cst_13 : f32 to vector<8x128xf32>
    %20 = arith.addf %19, %18 : vector<8x128xf32>
    %21 = arith.divf %19, %20 : vector<8x128xf32>
    %22 = vector.extract_strided_slice %15 {offsets = [0, 128], sizes = [8, 128], strides = [1, 1]} : vector<8x512xf32> to vector<8x128xf32>
    %23 = arith.negf %22 : vector<8x128xf32>
    %24 = math.exp %23 : vector<8x128xf32>
    %cst_14 = arith.constant 1.000000e+00 : f32
    %25 = vector.broadcast %cst_14 : f32 to vector<8x128xf32>
    %26 = arith.addf %25, %24 : vector<8x128xf32>
    %27 = arith.divf %25, %26 : vector<8x128xf32>
    %28 = vector.extract_strided_slice %15 {offsets = [0, 256], sizes = [8, 128], strides = [1, 1]} : vector<8x512xf32> to vector<8x128xf32>
    %29 = math.tanh %28 : vector<8x128xf32>
    %30 = vector.extract_strided_slice %15 {offsets = [0, 384], sizes = [8, 128], strides = [1, 1]} : vector<8x512xf32> to vector<8x128xf32>
    %31 = arith.negf %30 : vector<8x128xf32>
    %32 = math.exp %31 : vector<8x128xf32>
    %cst_15 = arith.constant 1.000000e+00 : f32
    %33 = vector.broadcast %cst_15 : f32 to vector<8x128xf32>
    %34 = arith.addf %33, %32 : vector<8x128xf32>
    %35 = arith.divf %33, %34 : vector<8x128xf32>
    %36 = arith.mulf %27, %8 : vector<8x128xf32>
    %37 = arith.mulf %21, %29 : vector<8x128xf32>
    %38 = arith.addf %36, %37 : vector<8x128xf32>
    %39 = math.tanh %38 : vector<8x128xf32>
    %40 = arith.mulf %35, %39 : vector<8x128xf32>
    %c1_i32 = arith.constant 1 : i32
    %c8_i32_16 = arith.constant 8 : i32
    %41 = arith.muli %c1_i32, %c8_i32_16 : i32
    %42 = arith.index_cast %41 : i32 to index
    %c0_17 = arith.constant 0 : index
    %43 = vector.load %arg7[%42, %c0_17] : memref<64x512xf32, #tpu.memory_space<vmem>>, vector<8x512xf32>
    %44 = arith.truncf %40 : vector<8x128xf32> to vector<8x128xbf16>
    %c0_18 = arith.constant 0 : index
    %c0_19 = arith.constant 0 : index
    %45 = vector.load %arg2[%c0_18, %c0_19] : memref<128x512xbf16, #tpu.memory_space<vmem>>, vector<128x512xbf16>
    %cst_20 = arith.constant dense<0.000000e+00> : vector<8x512xf32>
    %46 = tpu.matmul %44, %45, %cst_20 {dimension_numbers = #tpu.dot_dimension_numbers<[1], [0], [0], [1], [0, 0, 1, 1], [], []>} : vector<8x128xbf16>, vector<128x512xbf16>, vector<8x512xf32> -> vector<8x512xf32>
    %47 = arith.addf %43, %46 : vector<8x512xf32>
    %48 = vector.extract_strided_slice %47 {offsets = [0, 0], sizes = [8, 128], strides = [1, 1]} : vector<8x512xf32> to vector<8x128xf32>
    %49 = arith.negf %48 : vector<8x128xf32>
    %50 = math.exp %49 : vector<8x128xf32>
    %cst_21 = arith.constant 1.000000e+00 : f32
    %51 = vector.broadcast %cst_21 : f32 to vector<8x128xf32>
    %52 = arith.addf %51, %50 : vector<8x128xf32>
    %53 = arith.divf %51, %52 : vector<8x128xf32>
    %54 = vector.extract_strided_slice %47 {offsets = [0, 128], sizes = [8, 128], strides = [1, 1]} : vector<8x512xf32> to vector<8x128xf32>
    %55 = arith.negf %54 : vector<8x128xf32>
    %56 = math.exp %55 : vector<8x128xf32>
    %cst_22 = arith.constant 1.000000e+00 : f32
    %57 = vector.broadcast %cst_22 : f32 to vector<8x128xf32>
    %58 = arith.addf %57, %56 : vector<8x128xf32>
    %59 = arith.divf %57, %58 : vector<8x128xf32>
    %60 = vector.extract_strided_slice %47 {offsets = [0, 256], sizes = [8, 128], strides = [1, 1]} : vector<8x512xf32> to vector<8x128xf32>
    %61 = math.tanh %60 : vector<8x128xf32>
    %62 = vector.extract_strided_slice %47 {offsets = [0, 384], sizes = [8, 128], strides = [1, 1]} : vector<8x512xf32> to vector<8x128xf32>
    %63 = arith.negf %62 : vector<8x128xf32>
    %64 = math.exp %63 : vector<8x128xf32>
    %cst_23 = arith.constant 1.000000e+00 : f32
    %65 = vector.broadcast %cst_23 : f32 to vector<8x128xf32>
    %66 = arith.addf %65, %64 : vector<8x128xf32>
    %67 = arith.divf %65, %66 : vector<8x128xf32>
    %68 = arith.mulf %59, %38 : vector<8x128xf32>
    %69 = arith.mulf %53, %61 : vector<8x128xf32>
    %70 = arith.addf %68, %69 : vector<8x128xf32>
    %71 = math.tanh %70 : vector<8x128xf32>
    %72 = arith.mulf %67, %71 : vector<8x128xf32>
    %c2_i32 = arith.constant 2 : i32
    %c8_i32_24 = arith.constant 8 : i32
    %73 = arith.muli %c2_i32, %c8_i32_24 : i32
    %74 = arith.index_cast %73 : i32 to index
    %c0_25 = arith.constant 0 : index
    %75 = vector.load %arg7[%74, %c0_25] : memref<64x512xf32, #tpu.memory_space<vmem>>, vector<8x512xf32>
    %76 = arith.truncf %72 : vector<8x128xf32> to vector<8x128xbf16>
    %c0_26 = arith.constant 0 : index
    %c0_27 = arith.constant 0 : index
    %77 = vector.load %arg2[%c0_26, %c0_27] : memref<128x512xbf16, #tpu.memory_space<vmem>>, vector<128x512xbf16>
    %cst_28 = arith.constant dense<0.000000e+00> : vector<8x512xf32>
    %78 = tpu.matmul %76, %77, %cst_28 {dimension_numbers = #tpu.dot_dimension_numbers<[1], [0], [0], [1], [0, 0, 1, 1], [], []>} : vector<8x128xbf16>, vector<128x512xbf16>, vector<8x512xf32> -> vector<8x512xf32>
    %79 = arith.addf %75, %78 : vector<8x512xf32>
    %80 = vector.extract_strided_slice %79 {offsets = [0, 0], sizes = [8, 128], strides = [1, 1]} : vector<8x512xf32> to vector<8x128xf32>
    %81 = arith.negf %80 : vector<8x128xf32>
    %82 = math.exp %81 : vector<8x128xf32>
    %cst_29 = arith.constant 1.000000e+00 : f32
    %83 = vector.broadcast %cst_29 : f32 to vector<8x128xf32>
    %84 = arith.addf %83, %82 : vector<8x128xf32>
    %85 = arith.divf %83, %84 : vector<8x128xf32>
    %86 = vector.extract_strided_slice %79 {offsets = [0, 128], sizes = [8, 128], strides = [1, 1]} : vector<8x512xf32> to vector<8x128xf32>
    %87 = arith.negf %86 : vector<8x128xf32>
    %88 = math.exp %87 : vector<8x128xf32>
    %cst_30 = arith.constant 1.000000e+00 : f32
    %89 = vector.broadcast %cst_30 : f32 to vector<8x128xf32>
    %90 = arith.addf %89, %88 : vector<8x128xf32>
    %91 = arith.divf %89, %90 : vector<8x128xf32>
    %92 = vector.extract_strided_slice %79 {offsets = [0, 256], sizes = [8, 128], strides = [1, 1]} : vector<8x512xf32> to vector<8x128xf32>
    %93 = math.tanh %92 : vector<8x128xf32>
    %94 = vector.extract_strided_slice %79 {offsets = [0, 384], sizes = [8, 128], strides = [1, 1]} : vector<8x512xf32> to vector<8x128xf32>
    %95 = arith.negf %94 : vector<8x128xf32>
    %96 = math.exp %95 : vector<8x128xf32>
    %cst_31 = arith.constant 1.000000e+00 : f32
    %97 = vector.broadcast %cst_31 : f32 to vector<8x128xf32>
    %98 = arith.addf %97, %96 : vector<8x128xf32>
    %99 = arith.divf %97, %98 : vector<8x128xf32>
    %100 = arith.mulf %91, %70 : vector<8x128xf32>
    %101 = arith.mulf %85, %93 : vector<8x128xf32>
    %102 = arith.addf %100, %101 : vector<8x128xf32>
    %103 = math.tanh %102 : vector<8x128xf32>
    %104 = arith.mulf %99, %103 : vector<8x128xf32>
    %c3_i32 = arith.constant 3 : i32
    %c8_i32_32 = arith.constant 8 : i32
    %105 = arith.muli %c3_i32, %c8_i32_32 : i32
    %106 = arith.index_cast %105 : i32 to index
    %c0_33 = arith.constant 0 : index
    %107 = vector.load %arg7[%106, %c0_33] : memref<64x512xf32, #tpu.memory_space<vmem>>, vector<8x512xf32>
    %108 = arith.truncf %104 : vector<8x128xf32> to vector<8x128xbf16>
    %c0_34 = arith.constant 0 : index
    %c0_35 = arith.constant 0 : index
    %109 = vector.load %arg2[%c0_34, %c0_35] : memref<128x512xbf16, #tpu.memory_space<vmem>>, vector<128x512xbf16>
    %cst_36 = arith.constant dense<0.000000e+00> : vector<8x512xf32>
    %110 = tpu.matmul %108, %109, %cst_36 {dimension_numbers = #tpu.dot_dimension_numbers<[1], [0], [0], [1], [0, 0, 1, 1], [], []>} : vector<8x128xbf16>, vector<128x512xbf16>, vector<8x512xf32> -> vector<8x512xf32>
    %111 = arith.addf %107, %110 : vector<8x512xf32>
    %112 = vector.extract_strided_slice %111 {offsets = [0, 0], sizes = [8, 128], strides = [1, 1]} : vector<8x512xf32> to vector<8x128xf32>
    %113 = arith.negf %112 : vector<8x128xf32>
    %114 = math.exp %113 : vector<8x128xf32>
    %cst_37 = arith.constant 1.000000e+00 : f32
    %115 = vector.broadcast %cst_37 : f32 to vector<8x128xf32>
    %116 = arith.addf %115, %114 : vector<8x128xf32>
    %117 = arith.divf %115, %116 : vector<8x128xf32>
    %118 = vector.extract_strided_slice %111 {offsets = [0, 128], sizes = [8, 128], strides = [1, 1]} : vector<8x512xf32> to vector<8x128xf32>
    %119 = arith.negf %118 : vector<8x128xf32>
    %120 = math.exp %119 : vector<8x128xf32>
    %cst_38 = arith.constant 1.000000e+00 : f32
    %121 = vector.broadcast %cst_38 : f32 to vector<8x128xf32>
    %122 = arith.addf %121, %120 : vector<8x128xf32>
    %123 = arith.divf %121, %122 : vector<8x128xf32>
    %124 = vector.extract_strided_slice %111 {offsets = [0, 256], sizes = [8, 128], strides = [1, 1]} : vector<8x512xf32> to vector<8x128xf32>
    %125 = math.tanh %124 : vector<8x128xf32>
    %126 = vector.extract_strided_slice %111 {offsets = [0, 384], sizes = [8, 128], strides = [1, 1]} : vector<8x512xf32> to vector<8x128xf32>
    %127 = arith.negf %126 : vector<8x128xf32>
    %128 = math.exp %127 : vector<8x128xf32>
    %cst_39 = arith.constant 1.000000e+00 : f32
    %129 = vector.broadcast %cst_39 : f32 to vector<8x128xf32>
    %130 = arith.addf %129, %128 : vector<8x128xf32>
    %131 = arith.divf %129, %130 : vector<8x128xf32>
    %132 = arith.mulf %123, %102 : vector<8x128xf32>
    %133 = arith.mulf %117, %125 : vector<8x128xf32>
    %134 = arith.addf %132, %133 : vector<8x128xf32>
    %135 = math.tanh %134 : vector<8x128xf32>
    %136 = arith.mulf %131, %135 : vector<8x128xf32>
    %c4_i32 = arith.constant 4 : i32
    %c8_i32_40 = arith.constant 8 : i32
    %137 = arith.muli %c4_i32, %c8_i32_40 : i32
    %138 = arith.index_cast %137 : i32 to index
    %c0_41 = arith.constant 0 : index
    %139 = vector.load %arg7[%138, %c0_41] : memref<64x512xf32, #tpu.memory_space<vmem>>, vector<8x512xf32>
    %140 = arith.truncf %136 : vector<8x128xf32> to vector<8x128xbf16>
    %c0_42 = arith.constant 0 : index
    %c0_43 = arith.constant 0 : index
    %141 = vector.load %arg2[%c0_42, %c0_43] : memref<128x512xbf16, #tpu.memory_space<vmem>>, vector<128x512xbf16>
    %cst_44 = arith.constant dense<0.000000e+00> : vector<8x512xf32>
    %142 = tpu.matmul %140, %141, %cst_44 {dimension_numbers = #tpu.dot_dimension_numbers<[1], [0], [0], [1], [0, 0, 1, 1], [], []>} : vector<8x128xbf16>, vector<128x512xbf16>, vector<8x512xf32> -> vector<8x512xf32>
    %143 = arith.addf %139, %142 : vector<8x512xf32>
    %144 = vector.extract_strided_slice %143 {offsets = [0, 0], sizes = [8, 128], strides = [1, 1]} : vector<8x512xf32> to vector<8x128xf32>
    %145 = arith.negf %144 : vector<8x128xf32>
    %146 = math.exp %145 : vector<8x128xf32>
    %cst_45 = arith.constant 1.000000e+00 : f32
    %147 = vector.broadcast %cst_45 : f32 to vector<8x128xf32>
    %148 = arith.addf %147, %146 : vector<8x128xf32>
    %149 = arith.divf %147, %148 : vector<8x128xf32>
    %150 = vector.extract_strided_slice %143 {offsets = [0, 128], sizes = [8, 128], strides = [1, 1]} : vector<8x512xf32> to vector<8x128xf32>
    %151 = arith.negf %150 : vector<8x128xf32>
    %152 = math.exp %151 : vector<8x128xf32>
    %cst_46 = arith.constant 1.000000e+00 : f32
    %153 = vector.broadcast %cst_46 : f32 to vector<8x128xf32>
    %154 = arith.addf %153, %152 : vector<8x128xf32>
    %155 = arith.divf %153, %154 : vector<8x128xf32>
    %156 = vector.extract_strided_slice %143 {offsets = [0, 256], sizes = [8, 128], strides = [1, 1]} : vector<8x512xf32> to vector<8x128xf32>
    %157 = math.tanh %156 : vector<8x128xf32>
    %158 = vector.extract_strided_slice %143 {offsets = [0, 384], sizes = [8, 128], strides = [1, 1]} : vector<8x512xf32> to vector<8x128xf32>
    %159 = arith.negf %158 : vector<8x128xf32>
    %160 = math.exp %159 : vector<8x128xf32>
    %cst_47 = arith.constant 1.000000e+00 : f32
    %161 = vector.broadcast %cst_47 : f32 to vector<8x128xf32>
    %162 = arith.addf %161, %160 : vector<8x128xf32>
    %163 = arith.divf %161, %162 : vector<8x128xf32>
    %164 = arith.mulf %155, %134 : vector<8x128xf32>
    %165 = arith.mulf %149, %157 : vector<8x128xf32>
    %166 = arith.addf %164, %165 : vector<8x128xf32>
    %167 = math.tanh %166 : vector<8x128xf32>
    %168 = arith.mulf %163, %167 : vector<8x128xf32>
    %c5_i32 = arith.constant 5 : i32
    %c8_i32_48 = arith.constant 8 : i32
    %169 = arith.muli %c5_i32, %c8_i32_48 : i32
    %170 = arith.index_cast %169 : i32 to index
    %c0_49 = arith.constant 0 : index
    %171 = vector.load %arg7[%170, %c0_49] : memref<64x512xf32, #tpu.memory_space<vmem>>, vector<8x512xf32>
    %172 = arith.truncf %168 : vector<8x128xf32> to vector<8x128xbf16>
    %c0_50 = arith.constant 0 : index
    %c0_51 = arith.constant 0 : index
    %173 = vector.load %arg2[%c0_50, %c0_51] : memref<128x512xbf16, #tpu.memory_space<vmem>>, vector<128x512xbf16>
    %cst_52 = arith.constant dense<0.000000e+00> : vector<8x512xf32>
    %174 = tpu.matmul %172, %173, %cst_52 {dimension_numbers = #tpu.dot_dimension_numbers<[1], [0], [0], [1], [0, 0, 1, 1], [], []>} : vector<8x128xbf16>, vector<128x512xbf16>, vector<8x512xf32> -> vector<8x512xf32>
    %175 = arith.addf %171, %174 : vector<8x512xf32>
    %176 = vector.extract_strided_slice %175 {offsets = [0, 0], sizes = [8, 128], strides = [1, 1]} : vector<8x512xf32> to vector<8x128xf32>
    %177 = arith.negf %176 : vector<8x128xf32>
    %178 = math.exp %177 : vector<8x128xf32>
    %cst_53 = arith.constant 1.000000e+00 : f32
    %179 = vector.broadcast %cst_53 : f32 to vector<8x128xf32>
    %180 = arith.addf %179, %178 : vector<8x128xf32>
    %181 = arith.divf %179, %180 : vector<8x128xf32>
    %182 = vector.extract_strided_slice %175 {offsets = [0, 128], sizes = [8, 128], strides = [1, 1]} : vector<8x512xf32> to vector<8x128xf32>
    %183 = arith.negf %182 : vector<8x128xf32>
    %184 = math.exp %183 : vector<8x128xf32>
    %cst_54 = arith.constant 1.000000e+00 : f32
    %185 = vector.broadcast %cst_54 : f32 to vector<8x128xf32>
    %186 = arith.addf %185, %184 : vector<8x128xf32>
    %187 = arith.divf %185, %186 : vector<8x128xf32>
    %188 = vector.extract_strided_slice %175 {offsets = [0, 256], sizes = [8, 128], strides = [1, 1]} : vector<8x512xf32> to vector<8x128xf32>
    %189 = math.tanh %188 : vector<8x128xf32>
    %190 = vector.extract_strided_slice %175 {offsets = [0, 384], sizes = [8, 128], strides = [1, 1]} : vector<8x512xf32> to vector<8x128xf32>
    %191 = arith.negf %190 : vector<8x128xf32>
    %192 = math.exp %191 : vector<8x128xf32>
    %cst_55 = arith.constant 1.000000e+00 : f32
    %193 = vector.broadcast %cst_55 : f32 to vector<8x128xf32>
    %194 = arith.addf %193, %192 : vector<8x128xf32>
    %195 = arith.divf %193, %194 : vector<8x128xf32>
    %196 = arith.mulf %187, %166 : vector<8x128xf32>
    %197 = arith.mulf %181, %189 : vector<8x128xf32>
    %198 = arith.addf %196, %197 : vector<8x128xf32>
    %199 = math.tanh %198 : vector<8x128xf32>
    %200 = arith.mulf %195, %199 : vector<8x128xf32>
    %c6_i32 = arith.constant 6 : i32
    %c8_i32_56 = arith.constant 8 : i32
    %201 = arith.muli %c6_i32, %c8_i32_56 : i32
    %202 = arith.index_cast %201 : i32 to index
    %c0_57 = arith.constant 0 : index
    %203 = vector.load %arg7[%202, %c0_57] : memref<64x512xf32, #tpu.memory_space<vmem>>, vector<8x512xf32>
    %204 = arith.truncf %200 : vector<8x128xf32> to vector<8x128xbf16>
    %c0_58 = arith.constant 0 : index
    %c0_59 = arith.constant 0 : index
    %205 = vector.load %arg2[%c0_58, %c0_59] : memref<128x512xbf16, #tpu.memory_space<vmem>>, vector<128x512xbf16>
    %cst_60 = arith.constant dense<0.000000e+00> : vector<8x512xf32>
    %206 = tpu.matmul %204, %205, %cst_60 {dimension_numbers = #tpu.dot_dimension_numbers<[1], [0], [0], [1], [0, 0, 1, 1], [], []>} : vector<8x128xbf16>, vector<128x512xbf16>, vector<8x512xf32> -> vector<8x512xf32>
    %207 = arith.addf %203, %206 : vector<8x512xf32>
    %208 = vector.extract_strided_slice %207 {offsets = [0, 0], sizes = [8, 128], strides = [1, 1]} : vector<8x512xf32> to vector<8x128xf32>
    %209 = arith.negf %208 : vector<8x128xf32>
    %210 = math.exp %209 : vector<8x128xf32>
    %cst_61 = arith.constant 1.000000e+00 : f32
    %211 = vector.broadcast %cst_61 : f32 to vector<8x128xf32>
    %212 = arith.addf %211, %210 : vector<8x128xf32>
    %213 = arith.divf %211, %212 : vector<8x128xf32>
    %214 = vector.extract_strided_slice %207 {offsets = [0, 128], sizes = [8, 128], strides = [1, 1]} : vector<8x512xf32> to vector<8x128xf32>
    %215 = arith.negf %214 : vector<8x128xf32>
    %216 = math.exp %215 : vector<8x128xf32>
    %cst_62 = arith.constant 1.000000e+00 : f32
    %217 = vector.broadcast %cst_62 : f32 to vector<8x128xf32>
    %218 = arith.addf %217, %216 : vector<8x128xf32>
    %219 = arith.divf %217, %218 : vector<8x128xf32>
    %220 = vector.extract_strided_slice %207 {offsets = [0, 256], sizes = [8, 128], strides = [1, 1]} : vector<8x512xf32> to vector<8x128xf32>
    %221 = math.tanh %220 : vector<8x128xf32>
    %222 = vector.extract_strided_slice %207 {offsets = [0, 384], sizes = [8, 128], strides = [1, 1]} : vector<8x512xf32> to vector<8x128xf32>
    %223 = arith.negf %222 : vector<8x128xf32>
    %224 = math.exp %223 : vector<8x128xf32>
    %cst_63 = arith.constant 1.000000e+00 : f32
    %225 = vector.broadcast %cst_63 : f32 to vector<8x128xf32>
    %226 = arith.addf %225, %224 : vector<8x128xf32>
    %227 = arith.divf %225, %226 : vector<8x128xf32>
    %228 = arith.mulf %219, %198 : vector<8x128xf32>
    %229 = arith.mulf %213, %221 : vector<8x128xf32>
    %230 = arith.addf %228, %229 : vector<8x128xf32>
    %231 = math.tanh %230 : vector<8x128xf32>
    %232 = arith.mulf %227, %231 : vector<8x128xf32>
    %c7_i32 = arith.constant 7 : i32
    %c8_i32_64 = arith.constant 8 : i32
    %233 = arith.muli %c7_i32, %c8_i32_64 : i32
    %234 = arith.index_cast %233 : i32 to index
    %c0_65 = arith.constant 0 : index
    %235 = vector.load %arg7[%234, %c0_65] : memref<64x512xf32, #tpu.memory_space<vmem>>, vector<8x512xf32>
    %236 = arith.truncf %232 : vector<8x128xf32> to vector<8x128xbf16>
    %c0_66 = arith.constant 0 : index
    %c0_67 = arith.constant 0 : index
    %237 = vector.load %arg2[%c0_66, %c0_67] : memref<128x512xbf16, #tpu.memory_space<vmem>>, vector<128x512xbf16>
    %cst_68 = arith.constant dense<0.000000e+00> : vector<8x512xf32>
    %238 = tpu.matmul %236, %237, %cst_68 {dimension_numbers = #tpu.dot_dimension_numbers<[1], [0], [0], [1], [0, 0, 1, 1], [], []>} : vector<8x128xbf16>, vector<128x512xbf16>, vector<8x512xf32> -> vector<8x512xf32>
    %239 = arith.addf %235, %238 : vector<8x512xf32>
    %240 = vector.extract_strided_slice %239 {offsets = [0, 0], sizes = [8, 128], strides = [1, 1]} : vector<8x512xf32> to vector<8x128xf32>
    %241 = arith.negf %240 : vector<8x128xf32>
    %242 = math.exp %241 : vector<8x128xf32>
    %cst_69 = arith.constant 1.000000e+00 : f32
    %243 = vector.broadcast %cst_69 : f32 to vector<8x128xf32>
    %244 = arith.addf %243, %242 : vector<8x128xf32>
    %245 = arith.divf %243, %244 : vector<8x128xf32>
    %246 = vector.extract_strided_slice %239 {offsets = [0, 128], sizes = [8, 128], strides = [1, 1]} : vector<8x512xf32> to vector<8x128xf32>
    %247 = arith.negf %246 : vector<8x128xf32>
    %248 = math.exp %247 : vector<8x128xf32>
    %cst_70 = arith.constant 1.000000e+00 : f32
    %249 = vector.broadcast %cst_70 : f32 to vector<8x128xf32>
    %250 = arith.addf %249, %248 : vector<8x128xf32>
    %251 = arith.divf %249, %250 : vector<8x128xf32>
    %252 = vector.extract_strided_slice %239 {offsets = [0, 256], sizes = [8, 128], strides = [1, 1]} : vector<8x512xf32> to vector<8x128xf32>
    %253 = math.tanh %252 : vector<8x128xf32>
    %254 = vector.extract_strided_slice %239 {offsets = [0, 384], sizes = [8, 128], strides = [1, 1]} : vector<8x512xf32> to vector<8x128xf32>
    %255 = arith.negf %254 : vector<8x128xf32>
    %256 = math.exp %255 : vector<8x128xf32>
    %cst_71 = arith.constant 1.000000e+00 : f32
    %257 = vector.broadcast %cst_71 : f32 to vector<8x128xf32>
    %258 = arith.addf %257, %256 : vector<8x128xf32>
    %259 = arith.divf %257, %258 : vector<8x128xf32>
    %260 = arith.mulf %251, %230 : vector<8x128xf32>
    %261 = arith.mulf %245, %253 : vector<8x128xf32>
    %262 = arith.addf %260, %261 : vector<8x128xf32>
    %263 = math.tanh %262 : vector<8x128xf32>
    %264 = arith.mulf %259, %263 : vector<8x128xf32>
    %c8_i32_72 = arith.constant 8 : i32
    %c0_73 = arith.constant 0 : index
    %c0_74 = arith.constant 0 : index
    %265 = vector.load %arg4[%c0_73, %c0_74] : memref<128x128xf32, #tpu.memory_space<vmem>>, vector<128x128xf32>
    %cst_75 = arith.constant dense<0.000000e+00> : vector<8x128xf32>
    %266 = tpu.matmul %264, %265, %cst_75 {dimension_numbers = #tpu.dot_dimension_numbers<[1], [0], [0], [1], [0, 0, 1, 1], [], []>} : vector<8x128xf32>, vector<128x128xf32>, vector<8x128xf32> -> vector<8x128xf32>
    %c0_76 = arith.constant 0 : index
    %c0_77 = arith.constant 0 : index
    %267 = memref.load %arg5[%c0_76, %c0_77] : memref<1x1xf32, #tpu.memory_space<smem>>
    %268 = vector.broadcast %267 : f32 to vector<8x128xf32>
    %269 = arith.addf %266, %268 : vector<8x128xf32>
    %270 = arith.negf %269 : vector<8x128xf32>
    %271 = math.exp %270 : vector<8x128xf32>
    %cst_78 = arith.constant 1.000000e+00 : f32
    %272 = vector.broadcast %cst_78 : f32 to vector<8x128xf32>
    %273 = arith.addf %272, %271 : vector<8x128xf32>
    %274 = arith.divf %272, %273 : vector<8x128xf32>
    %c0_79 = arith.constant 0 : index
    %c0_80 = arith.constant 0 : index
    %275 = vector.load %arg6[%c0_79, %c0_80] : memref<8x128xf32, #tpu.memory_space<vmem>>, vector<8x128xf32>
    tpu.vector_store %arg6[%c0_79, %c0_80], %274 {strides = array<i32>} : memref<8x128xf32, #tpu.memory_space<vmem>>, vector<8x128xf32>,
    return
  }
}

</mosaic_0001>

<llo_original>
// kernel: lstm_model_forward.1
$region0: #{lstm_model_forward.1}
  #allocation0 [shape = 'u32[]', space=smem, size = 0x4, offset = 0x4, fixed_abs, tag = 'smem constant byte address 0x4 - core index']
  #allocation1 [shape = 'u32[144,128]{1,0:T(1,128)}', space=vmem, size = 0x12000, scoped, tag = 'internal scratch']
  #allocation2 [shape = 'f32[64,512]{1,0:T(8,128)}', space=vmem, size = 0x20000, scoped, tag = 'scratch operand']
  #allocation3 [shape = 'f32[1,1]{1,0:T(1,128)S(6)}', space=smem, size = 0x200, scoped, tag = 'scoped memory for lstm_model_forward.1']
  %s0 = inlined_call_operand.hbm [shape: bf16[64,128], index: 0, kind: input, shape index: {}]
  %s1 = inlined_call_operand.hbm [shape: bf16[128,512], index: 1, kind: input, shape index: {}]
  %s2 = inlined_call_operand.hbm [shape: bf16[128,512], index: 2, kind: input, shape index: {}]
  %s3 = inlined_call_operand.hbm [shape: f32[1,512], index: 3, kind: input, shape index: {}]
  %s4 = inlined_call_operand.hbm [shape: f32[128,128], index: 4, kind: input, shape index: {}]
  %s5 = inlined_call_operand.<no memory space> [shape: f32[1,1], index: 5, kind: input, shape index: {}]
  %s6 = inlined_call_operand.hbm [shape: f32[8,128], index: 6, kind: output, shape index: {}]
  %s7 = sld [smem:[#allocation0]]
  $region54: #{lstm_model_forward.1} parent=0
    _
  %s9 = ssub.s32 1, %s7
  %s10 = scalar_select 0, %s9, %s7
  %11 = sst [smem:[#allocation3]] %s5
  $region1: #{lstm_model_forward.1} parent=0
    #allocation4 [shape = 'u8[16384]{0}', space=vmem, size = 0x4000, scoped, tag = 'input window, operand 0, single buffered']
    #allocation5 [shape = 's32[1]{0}', space=sflag, size = 0x4, scoped, tag = 'scoped memory for lstm_model_forward.1']
    #allocation6 [shape = 's32[1]{0}', space=sflag, size = 0x4, scoped, tag = 'scoped memory for lstm_model_forward.1']
    #allocation7 [shape = 'u8[131072]{0}', space=vmem, size = 0x20000, scoped, tag = 'input window, operand 1, single buffered']
    #allocation8 [shape = 's32[1]{0}', space=sflag, size = 0x4, scoped, tag = 'scoped memory for lstm_model_forward.1']
    #allocation9 [shape = 'u8[131072]{0}', space=vmem, size = 0x20000, scoped, tag = 'input window, operand 2, single buffered']
    #allocation10 [shape = 'u8[2048]{0}', space=vmem, size = 0x800, scoped, tag = 'input window, operand 3, single buffered']
    #allocation11 [shape = 's32[1]{0}', space=sflag, size = 0x4, scoped, tag = 'scoped memory for lstm_model_forward.1']
    #allocation12 [shape = 'u8[65536]{0}', space=vmem, size = 0x10000, scoped, tag = 'input window, operand 4, single buffered']
    #allocation13 [shape = 'u8[4096]{0}', space=vmem, size = 0x1000, scoped, tag = 'output window, operand 0, single buffered']
    %12 = vsyncpa [#allocation5], 0
    %13 = vsyncpa [#allocation8], 0
    %14 = vsyncpa [#allocation11], 0
    %15 = vsyncpa [#allocation6], 0
    // Predicated region
    $region2: #{lstm_model_forward.1} parent=1 // pred_check
      _
    $region3: #{lstm_model_forward.1} parent=1 // pred_check_branch
      %17 = sbr.rel (0) target = $region5
    $region4: #{lstm_model_forward.1} parent=1 // pred_region
      %s19 = ssub.s32 512, 512
      %20 = vsyncadd [#allocation5], %s19
      %s21 = sshll.u32 [#allocation4], 4
      %s22 = int_to_ptr.vmem [resolvable:$true] %s21
      %27 = dma.hbm_to_vmem [thread:$0]  %s0, 512, %s22, [#allocation5], 64, 64, 4
    $region5: #{lstm_model_forward.1} parent=1 // pred_fallthru
      _
    // Predicated region
    $region6: #{lstm_model_forward.1} parent=1 // pred_check
      _
    $region7: #{lstm_model_forward.1} parent=1 // pred_check_branch
      %29 = sbr.rel (0) target = $region9
    $region8: #{lstm_model_forward.1} parent=1 // pred_region
      %s31 = ssub.s32 4096, 4096
      %32 = vsyncadd [#allocation8], %s31
      %s33 = sshll.u32 [#allocation7], 4
      %s34 = int_to_ptr.vmem [resolvable:$true] %s33
      %39 = dma.hbm_to_vmem [thread:$0]  %s1, 4096, %s34, [#allocation8], 256, 256, 16
    $region9: #{lstm_model_forward.1} parent=1 // pred_fallthru
      _
    // Predicated region
    $region10: #{lstm_model_forward.1} parent=1 // pred_check
      _
    $region11: #{lstm_model_forward.1} parent=1 // pred_check_branch
      %41 = sbr.rel (0) target = $region13
    $region12: #{lstm_model_forward.1} parent=1 // pred_region
      %s43 = ssub.s32 4096, 4096
      %44 = vsyncadd [#allocation8], %s43
      %s45 = sshll.u32 [#allocation9], 4
      %s46 = int_to_ptr.vmem [resolvable:$true] %s45
      %51 = dma.hbm_to_vmem [thread:$0]  %s2, 4096, %s46, [#allocation8], 256, 256, 16
    $region13: #{lstm_model_forward.1} parent=1 // pred_fallthru
      _
    // Predicated region
    $region14: #{lstm_model_forward.1} parent=1 // pred_check
      _
    $region15: #{lstm_model_forward.1} parent=1 // pred_check_branch
      %53 = sbr.rel (0) target = $region17
    $region16: #{lstm_model_forward.1} parent=1 // pred_region
      %s55 = ssub.s32 64, 64
      %56 = vsyncadd [#allocation11], %s55
      %s58 = sshll.u32 [#allocation10], 4
      %s59 = int_to_ptr.vmem [resolvable:$true] %s58
      %61 = dma.hbm_to_vmem [thread:$0]  %s3, 64, %s59, [#allocation11]
    $region17: #{lstm_model_forward.1} parent=1 // pred_fallthru
      _
    // Predicated region
    $region18: #{lstm_model_forward.1} parent=1 // pred_check
      _
    $region19: #{lstm_model_forward.1} parent=1 // pred_check_branch
      %63 = sbr.rel (0) target = $region21
    $region20: #{lstm_model_forward.1} parent=1 // pred_region
      %s65 = ssub.s32 2048, 2048
      %66 = vsyncadd [#allocation11], %s65
      %s67 = sshll.u32 [#allocation12], 4
      %s68 = int_to_ptr.vmem [resolvable:$true] %s67
      %73 = dma.hbm_to_vmem [thread:$0]  %s4, 2048, %s68, [#allocation11], 128, 128, 8
    $region21: #{lstm_model_forward.1} parent=1 // pred_fallthru
      _
    // Predicated region
    $region22: #{lstm_model_forward.1} parent=1 // pred_check
      _
    $region23: #{lstm_model_forward.1} parent=1 // pred_check_branch
      %75 = sbr.rel (0) target = $region25
    $region24: #{lstm_model_forward.1} parent=1 // pred_region
      _
    $region25: #{lstm_model_forward.1} parent=1 // pred_fallthru
      _
    // Predicated region
    $region26: #{lstm_model_forward.1} parent=1 // pred_check
      _
    $region27: #{lstm_model_forward.1} parent=1 // pred_check_branch
      %77 = sbr.rel (0) target = $region29
    $region28: #{lstm_model_forward.1} parent=1 // pred_region
      %78 = dma.done [#allocation5], 512
    $region29: #{lstm_model_forward.1} parent=1 // pred_fallthru
      _
    // Predicated region
    $region30: #{lstm_model_forward.1} parent=1 // pred_check
      _
    $region31: #{lstm_model_forward.1} parent=1 // pred_check_branch
      %80 = sbr.rel (0) target = $region33
    $region32: #{lstm_model_forward.1} parent=1 // pred_region
      %81 = dma.done [#allocation8], 4096
    $region33: #{lstm_model_forward.1} parent=1 // pred_fallthru
      _
    // Predicated region
    $region34: #{lstm_model_forward.1} parent=1 // pred_check
      _
    $region35: #{lstm_model_forward.1} parent=1 // pred_check_branch
      %83 = sbr.rel (0) target = $region37
    $region36: #{lstm_model_forward.1} parent=1 // pred_region
      %84 = dma.done [#allocation8], 4096
    $region37: #{lstm_model_forward.1} parent=1 // pred_fallthru
      _
    // Predicated region
    $region38: #{lstm_model_forward.1} parent=1 // pred_check
      _
    $region39: #{lstm_model_forward.1} parent=1 // pred_check_branch
      %86 = sbr.rel (0) target = $region41
    $region40: #{lstm_model_forward.1} parent=1 // pred_region
      %87 = dma.done [#allocation11], 64
    $region41: #{lstm_model_forward.1} parent=1 // pred_fallthru
      _
    // Predicated region
    $region42: #{lstm_model_forward.1} parent=1 // pred_check
      _
    $region43: #{lstm_model_forward.1} parent=1 // pred_check_branch
      %89 = sbr.rel (0) target = $region45
    $region44: #{lstm_model_forward.1} parent=1 // pred_region
      %90 = dma.done [#allocation11], 2048
    $region45: #{lstm_model_forward.1} parent=1 // pred_fallthru
      _
    %v92 = vld [vmem:[#allocation4] sm:$0xf]
    %v93 = vld [vmem:[#allocation4 + $0x4] sm:$0xf]
    %v94 = vld [vmem:[#allocation4 + $0x8] sm:$0xf]
    %v95 = vld [vmem:[#allocation4 + $0xc] sm:$0xf]
    %v96 = vld [vmem:[#allocation4 + $0x10] sm:$0xf]
    %v97 = vld [vmem:[#allocation4 + $0x14] sm:$0xf]
    %v98 = vld [vmem:[#allocation4 + $0x18] sm:$0xf]
    %v99 = vld [vmem:[#allocation4 + $0x1c] sm:$0xf]
    %v100 = vld [vmem:[#allocation7] sm:$0xff]
    %v101 = vld [vmem:[#allocation7 + $0x8] sm:$0xff]
    %v102 = vld [vmem:[#allocation7 + $0x10] sm:$0xff]
    %v103 = vld [vmem:[#allocation7 + $0x18] sm:$0xff]
    %v104 = vld [vmem:[#allocation7 + $0x20] sm:$0xff]
    %v105 = vld [vmem:[#allocation7 + $0x28] sm:$0xff]
    %v106 = vld [vmem:[#allocation7 + $0x30] sm:$0xff]
    %v107 = vld [vmem:[#allocation7 + $0x38] sm:$0xff]
    %v108 = vld [vmem:[#allocation7 + $0x40] sm:$0xff]
    %v109 = vld [vmem:[#allocation7 + $0x48] sm:$0xff]
    %v110 = vld [vmem:[#allocation7 + $0x50] sm:$0xff]
    %v111 = vld [vmem:[#allocation7 + $0x58] sm:$0xff]
    %v112 = vld [vmem:[#allocation7 + $0x60] sm:$0xff]
    %v113 = vld [vmem:[#allocation7 + $0x68] sm:$0xff]
    %v114 = vld [vmem:[#allocation7 + $0x70] sm:$0xff]
    %v115 = vld [vmem:[#allocation7 + $0x78] sm:$0xff]
    %v116 = vld [vmem:[#allocation7 + $0x80] sm:$0xff]
    %v117 = vld [vmem:[#allocation7 + $0x88] sm:$0xff]
    %v118 = vld [vmem:[#allocation7 + $0x90] sm:$0xff]
    %v119 = vld [vmem:[#allocation7 + $0x98] sm:$0xff]
    %v120 = vld [vmem:[#allocation7 + $0xa0] sm:$0xff]
    %v121 = vld [vmem:[#allocation7 + $0xa8] sm:$0xff]
    %v122 = vld [vmem:[#allocation7 + $0xb0] sm:$0xff]
    %v123 = vld [vmem:[#allocation7 + $0xb8] sm:$0xff]
    %v124 = vld [vmem:[#allocation7 + $0xc0] sm:$0xff]
    %v125 = vld [vmem:[#allocation7 + $0xc8] sm:$0xff]
    %v126 = vld [vmem:[#allocation7 + $0xd0] sm:$0xff]
    %v127 = vld [vmem:[#allocation7 + $0xd8] sm:$0xff]
    %v128 = vld [vmem:[#allocation7 + $0xe0] sm:$0xff]
    %v129 = vld [vmem:[#allocation7 + $0xe8] sm:$0xff]
    %v130 = vld [vmem:[#allocation7 + $0xf0] sm:$0xff]
    %v131 = vld [vmem:[#allocation7 + $0xf8] sm:$0xff]
    %v132 = vld [vmem:[#allocation10] sm:$0xf]
    %v134 = vlaneseq
    %v135 = vshrl.u32 %v134, 7
    %v136 = vsub.s32 0, %v135
    %v137 = vrot.slane %v132, %v136
    %v138 = vlaneseq
    %v139 = vshrl.u32 %v138, 7
    %v140 = vsub.s32 1, %v139
    %v141 = vrot.slane %v132, %v140
    %v142 = vlaneseq
    %v143 = vshrl.u32 %v142, 7
    %v144 = vsub.s32 2, %v143
    %v145 = vrot.slane %v132, %v144
    %v146 = vlaneseq
    %v147 = vshrl.u32 %v146, 7
    %v148 = vsub.s32 3, %v147
    %v149 = vrot.slane %v132, %v148
    %v162 = vunpack.c.l.b16 %v92
    %v163 = vunpack.c.l.b16 %v93
    %v164 = vunpack.c.l.b16 %v94
    %v165 = vunpack.c.l.b16 %v95
    %v166 = vunpack.c.l.b16 %v96
    %v167 = vunpack.c.l.b16 %v97
    %v168 = vunpack.c.l.b16 %v98
    %v169 = vunpack.c.l.b16 %v99
    %v170 = vpack.c.b16 %v163, %v162
    %v171 = vpack.c.b16 %v165, %v164
    %v172 = vpack.c.b16 %v167, %v166
    %v173 = vpack.c.b16 %v169, %v168
    %v210 = vunpack.c.l.b16 %v100
    %v211 = vunpack.c.h.b16 %v100
    %v212 = vunpack.c.l.b16 %v101
    %v213 = vunpack.c.h.b16 %v101
    %v214 = vunpack.c.l.b16 %v102
    %v215 = vunpack.c.h.b16 %v102
    %v216 = vunpack.c.l.b16 %v103
    %v217 = vunpack.c.h.b16 %v103
    %v218 = vunpack.c.l.b16 %v104
    %v219 = vunpack.c.h.b16 %v104
    %v220 = vunpack.c.l.b16 %v105
    %v221 = vunpack.c.h.b16 %v105
    %v222 = vunpack.c.l.b16 %v106
    %v223 = vunpack.c.h.b16 %v106
    %v224 = vunpack.c.l.b16 %v107
    %v225 = vunpack.c.h.b16 %v107
    %v226 = vunpack.c.l.b16 %v108
    %v227 = vunpack.c.h.b16 %v108
    %v228 = vunpack.c.l.b16 %v109
    %v229 = vunpack.c.h.b16 %v109
    %v230 = vunpack.c.l.b16 %v110
    %v231 = vunpack.c.h.b16 %v110
    %v232 = vunpack.c.l.b16 %v111
    %v233 = vunpack.c.h.b16 %v111
    %v234 = vunpack.c.l.b16 %v112
    %v235 = vunpack.c.h.b16 %v112
    %v236 = vunpack.c.l.b16 %v113
    %v237 = vunpack.c.h.b16 %v113
    %v238 = vunpack.c.l.b16 %v114
    %v239 = vunpack.c.h.b16 %v114
    %v240 = vunpack.c.l.b16 %v115
    %v241 = vunpack.c.h.b16 %v115
    %v242 = vunpack.c.l.b16 %v116
    %v243 = vunpack.c.h.b16 %v116
    %v244 = vunpack.c.l.b16 %v117
    %v245 = vunpack.c.h.b16 %v117
    %v246 = vunpack.c.l.b16 %v118
    %v247 = vunpack.c.h.b16 %v118
    %v248 = vunpack.c.l.b16 %v119
    %v249 = vunpack.c.h.b16 %v119
    %v250 = vunpack.c.l.b16 %v120
    %v251 = vunpack.c.h.b16 %v120
    %v252 = vunpack.c.l.b16 %v121
    %v253 = vunpack.c.h.b16 %v121
    %v254 = vunpack.c.l.b16 %v122
    %v255 = vunpack.c.h.b16 %v122
    %v256 = vunpack.c.l.b16 %v123
    %v257 = vunpack.c.h.b16 %v123
    %v258 = vunpack.c.l.b16 %v124
    %v259 = vunpack.c.h.b16 %v124
    %v260 = vunpack.c.l.b16 %v125
    %v261 = vunpack.c.h.b16 %v125
    %v262 = vunpack.c.l.b16 %v126
    %v263 = vunpack.c.h.b16 %v126
    %v264 = vunpack.c.l.b16 %v127
    %v265 = vunpack.c.h.b16 %v127
    %v266 = vunpack.c.l.b16 %v128
    %v267 = vunpack.c.h.b16 %v128
    %v268 = vunpack.c.l.b16 %v129
    %v269 = vunpack.c.h.b16 %v129
    %v270 = vunpack.c.l.b16 %v130
    %v271 = vunpack.c.h.b16 %v130
    %v272 = vunpack.c.l.b16 %v131
    %v273 = vunpack.c.h.b16 %v131
    %v274 = vpack.c.b16 %v214, %v210
    %v275 = vpack.c.b16 %v215, %v211
    %v276 = vpack.c.b16 %v216, %v212
    %v277 = vpack.c.b16 %v217, %v213
    %v278 = vpack.c.b16 %v222, %v218
    %v279 = vpack.c.b16 %v223, %v219
    %v280 = vpack.c.b16 %v224, %v220
    %v281 = vpack.c.b16 %v225, %v221
    %v282 = vpack.c.b16 %v230, %v226
    %v283 = vpack.c.b16 %v231, %v227
    %v284 = vpack.c.b16 %v232, %v228
    %v285 = vpack.c.b16 %v233, %v229
    %v286 = vpack.c.b16 %v238, %v234
    %v287 = vpack.c.b16 %v239, %v235
    %v288 = vpack.c.b16 %v240, %v236
    %v289 = vpack.c.b16 %v241, %v237
    %v290 = vpack.c.b16 %v246, %v242
    %v291 = vpack.c.b16 %v247, %v243
    %v292 = vpack.c.b16 %v248, %v244
    %v293 = vpack.c.b16 %v249, %v245
    %v294 = vpack.c.b16 %v254, %v250
    %v295 = vpack.c.b16 %v255, %v251
    %v296 = vpack.c.b16 %v256, %v252
    %v297 = vpack.c.b16 %v257, %v253
    %v298 = vpack.c.b16 %v262, %v258
    %v299 = vpack.c.b16 %v263, %v259
    %v300 = vpack.c.b16 %v264, %v260
    %v301 = vpack.c.b16 %v265, %v261
    %v302 = vpack.c.b16 %v270, %v266
    %v303 = vpack.c.b16 %v271, %v267
    %v304 = vpack.c.b16 %v272, %v268
    %v305 = vpack.c.b16 %v273, %v269
    %338 = vmatprep.subr.bf16.mxu0 %v275
    %339 = vmatpush1.bf16.msra.mxu0 %v274
    %340 = vmatprep.subr.bf16.mxu0 %v279
    %341 = vmatpush1.bf16.msra.mxu0 %v278
    %342 = vmatprep.subr.bf16.mxu0 %v283
    %343 = vmatpush1.bf16.msra.mxu0 %v282
    %344 = vmatprep.subr.bf16.mxu0 %v287
    %345 = vmatpush1.bf16.msra.mxu0 %v286
    %346 = vmatprep.subr.bf16.mxu0 %v291
    %347 = vmatpush1.bf16.msra.mxu0 %v290
    %348 = vmatprep.subr.bf16.mxu0 %v295
    %349 = vmatpush1.bf16.msra.mxu0 %v294
    %350 = vmatprep.subr.bf16.mxu0 %v299
    %351 = vmatpush1.bf16.msra.mxu0 %v298
    %352 = vmatprep.subr.bf16.mxu0 %v303
    %353 = vmatpush1.bf16.msra.mxu0 %v302
    %354 = vmatprep.subr.bf16.mxu0 0
    %355 = vmatpush1.bf16.msra.mxu0 0
    %356 = vmatprep.subr.bf16.mxu0 0
    %357 = vmatpush1.bf16.msra.mxu0 0
    %358 = vmatprep.subr.bf16.mxu0 0
    %359 = vmatpush1.bf16.msra.mxu0 0
    %360 = vmatprep.subr.bf16.mxu0 0
    %361 = vmatpush1.bf16.msra.mxu0 0
    %362 = vmatprep.subr.bf16.mxu0 0
    %363 = vmatpush1.bf16.msra.mxu0 0
    %364 = vmatprep.subr.bf16.mxu0 0
    %365 = vmatpush1.bf16.msra.mxu0 0
    %366 = vmatprep.subr.bf16.mxu0 0
    %367 = vmatpush1.bf16.msra.mxu0 0
    %368 = vmatprep.subr.bf16.mxu0 0
    %369 = vmatpush1.bf16.msra.mxu0 0
    %370 = vmatprep.mubr.bf16.mxu0 0
    %371 = vmatmul.mubr.bf16.gmra.mrb[0].mxu0 %v170
    %v372 = vpop.f32.mrb[0].mxu0
    %v373 = vadd.f32 %v137, %v372
    %v374 = vpop.f32.mrb[0].mxu0
    %v375 = vadd.f32 %v141, %v374
    %v376 = vpop.f32.mrb[0].mxu0
    %v377 = vadd.f32 %v137, %v376
    %v378 = vpop.f32.mrb[0].mxu0
    %v379 = vadd.f32 %v141, %v378
    %380 = vmatprep.mubr.bf16.mxu0 0
    %381 = vmatmul.mubr.bf16.gmra.mrb[0].mxu0 %v171
    %v382 = vpop.f32.mrb[0].mxu0
    %v383 = vadd.f32 %v137, %v382
    %v384 = vpop.f32.mrb[0].mxu0
    %v385 = vadd.f32 %v141, %v384
    %v386 = vpop.f32.mrb[0].mxu0
    %v387 = vadd.f32 %v137, %v386
    %v388 = vpop.f32.mrb[0].mxu0
    %v389 = vadd.f32 %v141, %v388
    %390 = vmatprep.mubr.bf16.mxu0 0
    %391 = vmatmul.mubr.bf16.gmra.mrb[0].mxu0 %v172
    %v392 = vpop.f32.mrb[0].mxu0
    %v393 = vadd.f32 %v137, %v392
    %v394 = vpop.f32.mrb[0].mxu0
    %v395 = vadd.f32 %v141, %v394
    %v396 = vpop.f32.mrb[0].mxu0
    %v397 = vadd.f32 %v137, %v396
    %v398 = vpop.f32.mrb[0].mxu0
    %v399 = vadd.f32 %v141, %v398
    %400 = vmatprep.mubr.bf16.mxu0 0
    %401 = vmatmul.mubr.bf16.gmra.mrb[0].mxu0 %v173
    %v402 = vpop.f32.mrb[0].mxu0
    %v403 = vadd.f32 %v137, %v402
    %v404 = vpop.f32.mrb[0].mxu0
    %v405 = vadd.f32 %v141, %v404
    %v406 = vpop.f32.mrb[0].mxu0
    %v407 = vadd.f32 %v137, %v406
    %v408 = vpop.f32.mrb[0].mxu0
    %v409 = vadd.f32 %v141, %v408
    %410 = vdwg.mxu0
    %411 = vmatprep.subr.bf16.mxu0 %v277
    %412 = vmatpush1.bf16.msra.mxu0 %v276
    %413 = vmatprep.subr.bf16.mxu0 %v281
    %414 = vmatpush1.bf16.msra.mxu0 %v280
    %415 = vmatprep.subr.bf16.mxu0 %v285
    %416 = vmatpush1.bf16.msra.mxu0 %v284
    %417 = vmatprep.subr.bf16.mxu0 %v289
    %418 = vmatpush1.bf16.msra.mxu0 %v288
    %419 = vmatprep.subr.bf16.mxu0 %v293
    %420 = vmatpush1.bf16.msra.mxu0 %v292
    %421 = vmatprep.subr.bf16.mxu0 %v297
    %422 = vmatpush1.bf16.msra.mxu0 %v296
    %423 = vmatprep.subr.bf16.mxu0 %v301
    %424 = vmatpush1.bf16.msra.mxu0 %v300
    %425 = vmatprep.subr.bf16.mxu0 %v305
    %426 = vmatpush1.bf16.msra.mxu0 %v304
    %427 = vmatprep.subr.bf16.mxu0 0
    %428 = vmatpush1.bf16.msra.mxu0 0
    %429 = vmatprep.subr.bf16.mxu0 0
    %430 = vmatpush1.bf16.msra.mxu0 0
    %431 = vmatprep.subr.bf16.mxu0 0
    %432 = vmatpush1.bf16.msra.mxu0 0
    %433 = vmatprep.subr.bf16.mxu0 0
    %434 = vmatpush1.bf16.msra.mxu0 0
    %435 = vmatprep.subr.bf16.mxu0 0
    %436 = vmatpush1.bf16.msra.mxu0 0
    %437 = vmatprep.subr.bf16.mxu0 0
    %438 = vmatpush1.bf16.msra.mxu0 0
    %439 = vmatprep.subr.bf16.mxu0 0
    %440 = vmatpush1.bf16.msra.mxu0 0
    %441 = vmatprep.subr.bf16.mxu0 0
    %442 = vmatpush1.bf16.msra.mxu0 0
    %443 = vmatprep.mubr.bf16.mxu0 0
    %444 = vmatmul.mubr.bf16.gmra.mrb[0].mxu0 %v170
    %v445 = vpop.f32.mrb[0].mxu0
    %v446 = vadd.f32 %v145, %v445
    %v447 = vpop.f32.mrb[0].mxu0
    %v448 = vadd.f32 %v149, %v447
    %v449 = vpop.f32.mrb[0].mxu0
    %v450 = vadd.f32 %v145, %v449
    %v451 = vpop.f32.mrb[0].mxu0
    %v452 = vadd.f32 %v149, %v451
    %453 = vmatprep.mubr.bf16.mxu0 0
    %454 = vmatmul.mubr.bf16.gmra.mrb[0].mxu0 %v171
    %v455 = vpop.f32.mrb[0].mxu0
    %v456 = vadd.f32 %v145, %v455
    %v457 = vpop.f32.mrb[0].mxu0
    %v458 = vadd.f32 %v149, %v457
    %v459 = vpop.f32.mrb[0].mxu0
    %v460 = vadd.f32 %v145, %v459
    %v461 = vpop.f32.mrb[0].mxu0
    %v462 = vadd.f32 %v149, %v461
    %463 = vmatprep.mubr.bf16.mxu0 0
    %464 = vmatmul.mubr.bf16.gmra.mrb[0].mxu0 %v172
    %v465 = vpop.f32.mrb[0].mxu0
    %v466 = vadd.f32 %v145, %v465
    %v467 = vpop.f32.mrb[0].mxu0
    %v468 = vadd.f32 %v149, %v467
    %v469 = vpop.f32.mrb[0].mxu0
    %v470 = vadd.f32 %v145, %v469
    %v471 = vpop.f32.mrb[0].mxu0
    %v472 = vadd.f32 %v149, %v471
    %473 = vmatprep.mubr.bf16.mxu0 0
    %474 = vmatmul.mubr.bf16.gmra.mrb[0].mxu0 %v173
    %v475 = vpop.f32.mrb[0].mxu0
    %v476 = vadd.f32 %v145, %v475
    %v477 = vpop.f32.mrb[0].mxu0
    %v478 = vadd.f32 %v149, %v477
    %v479 = vpop.f32.mrb[0].mxu0
    %v480 = vadd.f32 %v145, %v479
    %v481 = vpop.f32.mrb[0].mxu0
    %v482 = vadd.f32 %v149, %v481
    %483 = vdwg.mxu0
    %484 = vst [vmem:[#allocation2] sm:$0xff] %v373
    %485 = vst [vmem:[#allocation2 + $0x8] sm:$0xff] %v375
    %486 = vst [vmem:[#allocation2 + $0x10] sm:$0xff] %v446
    %487 = vst [vmem:[#allocation2 + $0x18] sm:$0xff] %v448
    %488 = vst [vmem:[#allocation2 + $0x20] sm:$0xff] %v377
    %489 = vst [vmem:[#allocation2 + $0x28] sm:$0xff] %v379
    %490 = vst [vmem:[#allocation2 + $0x30] sm:$0xff] %v450
    %491 = vst [vmem:[#allocation2 + $0x38] sm:$0xff] %v452
    %492 = vst [vmem:[#allocation2 + $0x40] sm:$0xff] %v383
    %493 = vst [vmem:[#allocation2 + $0x48] sm:$0xff] %v385
    %494 = vst [vmem:[#allocation2 + $0x50] sm:$0xff] %v456
    %495 = vst [vmem:[#allocation2 + $0x58] sm:$0xff] %v458
    %496 = vst [vmem:[#allocation2 + $0x60] sm:$0xff] %v387
    %497 = vst [vmem:[#allocation2 + $0x68] sm:$0xff] %v389
    %498 = vst [vmem:[#allocation2 + $0x70] sm:$0xff] %v460
    %499 = vst [vmem:[#allocation2 + $0x78] sm:$0xff] %v462
    %500 = vst [vmem:[#allocation2 + $0x80] sm:$0xff] %v393
    %501 = vst [vmem:[#allocation2 + $0x88] sm:$0xff] %v395
    %502 = vst [vmem:[#allocation2 + $0x90] sm:$0xff] %v466
    %503 = vst [vmem:[#allocation2 + $0x98] sm:$0xff] %v468
    %504 = vst [vmem:[#allocation2 + $0xa0] sm:$0xff] %v397
    %505 = vst [vmem:[#allocation2 + $0xa8] sm:$0xff] %v399
    %506 = vst [vmem:[#allocation2 + $0xb0] sm:$0xff] %v470
    %507 = vst [vmem:[#allocation2 + $0xb8] sm:$0xff] %v472
    %508 = vst [vmem:[#allocation2 + $0xc0] sm:$0xff] %v403
    %509 = vst [vmem:[#allocation2 + $0xc8] sm:$0xff] %v405
    %510 = vst [vmem:[#allocation2 + $0xd0] sm:$0xff] %v476
    %511 = vst [vmem:[#allocation2 + $0xd8] sm:$0xff] %v478
    %512 = vst [vmem:[#allocation2 + $0xe0] sm:$0xff] %v407
    %513 = vst [vmem:[#allocation2 + $0xe8] sm:$0xff] %v409
    %514 = vst [vmem:[#allocation2 + $0xf0] sm:$0xff] %v480
    %515 = vst [vmem:[#allocation2 + $0xf8] sm:$0xff] %v482
    %v516 = vld [vmem:[#allocation2] sm:$0xff]
    %v517 = vld [vmem:[#allocation2 + $0x8] sm:$0xff]
    %v518 = vld [vmem:[#allocation2 + $0x10] sm:$0xff]
    %v519 = vld [vmem:[#allocation2 + $0x18] sm:$0xff]
    %v520 = vld [vmem:[#allocation9] sm:$0xff]
    %v521 = vld [vmem:[#allocation9 + $0x8] sm:$0xff]
    %v522 = vld [vmem:[#allocation9 + $0x10] sm:$0xff]
    %v523 = vld [vmem:[#allocation9 + $0x18] sm:$0xff]
    %v524 = vld [vmem:[#allocation9 + $0x20] sm:$0xff]
    %v525 = vld [vmem:[#allocation9 + $0x28] sm:$0xff]
    %v526 = vld [vmem:[#allocation9 + $0x30] sm:$0xff]
    %v527 = vld [vmem:[#allocation9 + $0x38] sm:$0xff]
    %v528 = vld [vmem:[#allocation9 + $0x40] sm:$0xff]
    %v529 = vld [vmem:[#allocation9 + $0x48] sm:$0xff]
    %v530 = vld [vmem:[#allocation9 + $0x50] sm:$0xff]
    %v531 = vld [vmem:[#allocation9 + $0x58] sm:$0xff]
    %v532 = vld [vmem:[#allocation9 + $0x60] sm:$0xff]
    %v533 = vld [vmem:[#allocation9 + $0x68] sm:$0xff]
    %v534 = vld [vmem:[#allocation9 + $0x70] sm:$0xff]
    %v535 = vld [vmem:[#allocation9 + $0x78] sm:$0xff]
    %v536 = vld [vmem:[#allocation9 + $0x80] sm:$0xff]
    %v537 = vld [vmem:[#allocation9 + $0x88] sm:$0xff]
    %v538 = vld [vmem:[#allocation9 + $0x90] sm:$0xff]
    %v539 = vld [vmem:[#allocation9 + $0x98] sm:$0xff]
    %v540 = vld [vmem:[#allocation9 + $0xa0] sm:$0xff]
    %v541 = vld [vmem:[#allocation9 + $0xa8] sm:$0xff]
    %v542 = vld [vmem:[#allocation9 + $0xb0] sm:$0xff]
    %v543 = vld [vmem:[#allocation9 + $0xb8] sm:$0xff]
    %v544 = vld [vmem:[#allocation9 + $0xc0] sm:$0xff]
    %v545 = vld [vmem:[#allocation9 + $0xc8] sm:$0xff]
    %v546 = vld [vmem:[#allocation9 + $0xd0] sm:$0xff]
    %v547 = vld [vmem:[#allocation9 + $0xd8] sm:$0xff]
    %v548 = vld [vmem:[#allocation9 + $0xe0] sm:$0xff]
    %v549 = vld [vmem:[#allocation9 + $0xe8] sm:$0xff]
    %v550 = vld [vmem:[#allocation9 + $0xf0] sm:$0xff]
    %v551 = vld [vmem:[#allocation9 + $0xf8] sm:$0xff]
    %v584 = vunpack.c.l.b16 %v520
    %v585 = vunpack.c.h.b16 %v520
    %v586 = vunpack.c.l.b16 %v521
    %v587 = vunpack.c.h.b16 %v521
    %v588 = vunpack.c.l.b16 %v522
    %v589 = vunpack.c.h.b16 %v522
    %v590 = vunpack.c.l.b16 %v523
    %v591 = vunpack.c.h.b16 %v523
    %v592 = vunpack.c.l.b16 %v524
    %v593 = vunpack.c.h.b16 %v524
    %v594 = vunpack.c.l.b16 %v525
    %v595 = vunpack.c.h.b16 %v525
    %v596 = vunpack.c.l.b16 %v526
    %v597 = vunpack.c.h.b16 %v526
    %v598 = vunpack.c.l.b16 %v527
    %v599 = vunpack.c.h.b16 %v527
    %v600 = vunpack.c.l.b16 %v528
    %v601 = vunpack.c.h.b16 %v528
    %v602 = vunpack.c.l.b16 %v529
    %v603 = vunpack.c.h.b16 %v529
    %v604 = vunpack.c.l.b16 %v530
    %v605 = vunpack.c.h.b16 %v530
    %v606 = vunpack.c.l.b16 %v531
    %v607 = vunpack.c.h.b16 %v531
    %v608 = vunpack.c.l.b16 %v532
    %v609 = vunpack.c.h.b16 %v532
    %v610 = vunpack.c.l.b16 %v533
    %v611 = vunpack.c.h.b16 %v533
    %v612 = vunpack.c.l.b16 %v534
    %v613 = vunpack.c.h.b16 %v534
    %v614 = vunpack.c.l.b16 %v535
    %v615 = vunpack.c.h.b16 %v535
    %v616 = vunpack.c.l.b16 %v536
    %v617 = vunpack.c.h.b16 %v536
    %v618 = vunpack.c.l.b16 %v537
    %v619 = vunpack.c.h.b16 %v537
    %v620 = vunpack.c.l.b16 %v538
    %v621 = vunpack.c.h.b16 %v538
    %v622 = vunpack.c.l.b16 %v539
    %v623 = vunpack.c.h.b16 %v539
    %v624 = vunpack.c.l.b16 %v540
    %v625 = vunpack.c.h.b16 %v540
    %v626 = vunpack.c.l.b16 %v541
    %v627 = vunpack.c.h.b16 %v541
    %v628 = vunpack.c.l.b16 %v542
    %v629 = vunpack.c.h.b16 %v542
    %v630 = vunpack.c.l.b16 %v543
    %v631 = vunpack.c.h.b16 %v543
    %v632 = vunpack.c.l.b16 %v544
    %v633 = vunpack.c.h.b16 %v544
    %v634 = vunpack.c.l.b16 %v545
    %v635 = vunpack.c.h.b16 %v545
    %v636 = vunpack.c.l.b16 %v546
    %v637 = vunpack.c.h.b16 %v546
    %v638 = vunpack.c.l.b16 %v547
    %v639 = vunpack.c.h.b16 %v547
    %v640 = vunpack.c.l.b16 %v548
    %v641 = vunpack.c.h.b16 %v548
    %v642 = vunpack.c.l.b16 %v549
    %v643 = vunpack.c.h.b16 %v549
    %v644 = vunpack.c.l.b16 %v550
    %v645 = vunpack.c.h.b16 %v550
    %v646 = vunpack.c.l.b16 %v551
    %v647 = vunpack.c.h.b16 %v551
    %v648 = vpack.c.b16 %v588, %v584
    %v649 = vpack.c.b16 %v589, %v585
    %v650 = vpack.c.b16 %v590, %v586
    %v651 = vpack.c.b16 %v591, %v587
    %v652 = vpack.c.b16 %v596, %v592
    %v653 = vpack.c.b16 %v597, %v593
    %v654 = vpack.c.b16 %v598, %v594
    %v655 = vpack.c.b16 %v599, %v595
    %v656 = vpack.c.b16 %v604, %v600
    %v657 = vpack.c.b16 %v605, %v601
    %v658 = vpack.c.b16 %v606, %v602
    %v659 = vpack.c.b16 %v607, %v603
    %v660 = vpack.c.b16 %v612, %v608
    %v661 = vpack.c.b16 %v613, %v609
    %v662 = vpack.c.b16 %v614, %v610
    %v663 = vpack.c.b16 %v615, %v611
    %v664 = vpack.c.b16 %v620, %v616
    %v665 = vpack.c.b16 %v621, %v617
    %v666 = vpack.c.b16 %v622, %v618
    %v667 = vpack.c.b16 %v623, %v619
    %v668 = vpack.c.b16 %v628, %v624
    %v669 = vpack.c.b16 %v629, %v625
    %v670 = vpack.c.b16 %v630, %v626
    %v671 = vpack.c.b16 %v631, %v627
    %v672 = vpack.c.b16 %v636, %v632
    %v673 = vpack.c.b16 %v637, %v633
    %v674 = vpack.c.b16 %v638, %v634
    %v675 = vpack.c.b16 %v639, %v635
    %v676 = vpack.c.b16 %v644, %v640
    %v677 = vpack.c.b16 %v645, %v641
    %v678 = vpack.c.b16 %v646, %v642
    %v679 = vpack.c.b16 %v647, %v643
    %712 = vmatprep.subr.bf16.mxu0 %v649
    %713 = vmatpush1.bf16.msra.mxu0 %v648
    %714 = vmatprep.subr.bf16.mxu0 %v653
    %715 = vmatpush1.bf16.msra.mxu0 %v652
    %716 = vmatprep.subr.bf16.mxu0 %v657
    %717 = vmatpush1.bf16.msra.mxu0 %v656
    %718 = vmatprep.subr.bf16.mxu0 %v661
    %719 = vmatpush1.bf16.msra.mxu0 %v660
    %720 = vmatprep.subr.bf16.mxu0 %v665
    %721 = vmatpush1.bf16.msra.mxu0 %v664
    %722 = vmatprep.subr.bf16.mxu0 %v669
    %723 = vmatpush1.bf16.msra.mxu0 %v668
    %724 = vmatprep.subr.bf16.mxu0 %v673
    %725 = vmatpush1.bf16.msra.mxu0 %v672
    %726 = vmatprep.subr.bf16.mxu0 %v677
    %727 = vmatpush1.bf16.msra.mxu0 %v676
    %728 = vmatprep.subr.bf16.mxu0 0
    %729 = vmatpush1.bf16.msra.mxu0 0
    %730 = vmatprep.subr.bf16.mxu0 0
    %731 = vmatpush1.bf16.msra.mxu0 0
    %732 = vmatprep.subr.bf16.mxu0 0
    %733 = vmatpush1.bf16.msra.mxu0 0
    %734 = vmatprep.subr.bf16.mxu0 0
    %735 = vmatpush1.bf16.msra.mxu0 0
    %736 = vmatprep.subr.bf16.mxu0 0
    %737 = vmatpush1.bf16.msra.mxu0 0
    %738 = vmatprep.subr.bf16.mxu0 0
    %739 = vmatpush1.bf16.msra.mxu0 0
    %740 = vmatprep.subr.bf16.mxu0 0
    %741 = vmatpush1.bf16.msra.mxu0 0
    %742 = vmatprep.subr.bf16.mxu0 0
    %743 = vmatpush1.bf16.msra.mxu0 0
    %744 = vmatprep.mubr.bf16.mxu0 0
    %745 = vmatmul.mubr.bf16.gmra.mrb[0].mxu0 0
    %v746 = vpop.f32.mrb[0].mxu0
    %v747 = vadd.f32 0.0, %v746
    %v748 = vpop.f32.mrb[0].mxu0
    %v749 = vadd.f32 0.0, %v748
    %v750 = vpop.f32.mrb[0].mxu0
    %v751 = vpop.f32.mrb[0].mxu0
    %752 = vdwg.mxu0
    %753 = vmatprep.subr.bf16.mxu0 %v651
    %754 = vmatpush1.bf16.msra.mxu0 %v650
    %755 = vmatprep.subr.bf16.mxu0 %v655
    %756 = vmatpush1.bf16.msra.mxu0 %v654
    %757 = vmatprep.subr.bf16.mxu0 %v659
    %758 = vmatpush1.bf16.msra.mxu0 %v658
    %759 = vmatprep.subr.bf16.mxu0 %v663
    %760 = vmatpush1.bf16.msra.mxu0 %v662
    %761 = vmatprep.subr.bf16.mxu0 %v667
    %762 = vmatpush1.bf16.msra.mxu0 %v666
    %763 = vmatprep.subr.bf16.mxu0 %v671
    %764 = vmatpush1.bf16.msra.mxu0 %v670
    %765 = vmatprep.subr.bf16.mxu0 %v675
    %766 = vmatpush1.bf16.msra.mxu0 %v674
    %767 = vmatprep.subr.bf16.mxu0 %v679
    %768 = vmatpush1.bf16.msra.mxu0 %v678
    %769 = vmatprep.subr.bf16.mxu0 0
    %770 = vmatpush1.bf16.msra.mxu0 0
    %771 = vmatprep.subr.bf16.mxu0 0
    %772 = vmatpush1.bf16.msra.mxu0 0
    %773 = vmatprep.subr.bf16.mxu0 0
    %774 = vmatpush1.bf16.msra.mxu0 0
    %775 = vmatprep.subr.bf16.mxu0 0
    %776 = vmatpush1.bf16.msra.mxu0 0
    %777 = vmatprep.subr.bf16.mxu0 0
    %778 = vmatpush1.bf16.msra.mxu0 0
    %779 = vmatprep.subr.bf16.mxu0 0
    %780 = vmatpush1.bf16.msra.mxu0 0
    %781 = vmatprep.subr.bf16.mxu0 0
    %782 = vmatpush1.bf16.msra.mxu0 0
    %783 = vmatprep.subr.bf16.mxu0 0
    %784 = vmatpush1.bf16.msra.mxu0 0
    %785 = vmatprep.mubr.bf16.mxu0 0
    %786 = vmatmul.mubr.bf16.gmra.mrb[0].mxu0 0
    %v787 = vpop.f32.mrb[0].mxu0
    %v788 = vadd.f32 0.0, %v787
    %v789 = vpop.f32.mrb[0].mxu0
    %v790 = vadd.f32 0.0, %v789
    %v791 = vpop.f32.mrb[0].mxu0
    %v792 = vpop.f32.mrb[0].mxu0
    %793 = vdwg.mxu0
    %v794 = vadd.f32 %v516, %v747
    %v795 = vadd.f32 %v517, %v749
    %v796 = vadd.f32 %v518, %v788
    %v797 = vadd.f32 %v519, %v790
    %v798 = vxor.u32 %v794, 2147483648
    %v799 = vmul.f32 %v798, 1.442695
    %v800 = vpow.pop %v799
    %v801 = vadd.f32 %v800, 1.0
    %v802 = vrcp.pop %v801
    %v803 = vmul.f32 1.0, %v802
    %v804 = vxor.u32 %v795, 2147483648
    %v805 = vmul.f32 %v804, 1.442695
    %v806 = vpow.pop %v805
    %v807 = vadd.f32 %v806, 1.0
    %v808 = vrcp.pop %v807
    %v809 = vmul.f32 1.0, %v808
    %v810 = vtanh.pop %v796
    %v811 = vxor.u32 %v797, 2147483648
    %v812 = vmul.f32 %v811, 1.442695
    %v813 = vpow.pop %v812
    %v814 = vadd.f32 %v813, 1.0
    %v815 = vrcp.pop %v814
    %v816 = vmul.f32 1.0, %v815
    %v817 = vmul.f32 %v809, 0.0
    %v818 = vmul.f32 %v803, %v810
    %v819 = vadd.f32 %v817, %v818
    %v820 = vtanh.pop %v819
    %v821 = vmul.f32 %v816, %v820
    %v822 = vld [vmem:[#allocation2 + $0x20] sm:$0xff]
    %v823 = vld [vmem:[#allocation2 + $0x28] sm:$0xff]
    %v824 = vld [vmem:[#allocation2 + $0x30] sm:$0xff]
    %v825 = vld [vmem:[#allocation2 + $0x38] sm:$0xff]
    %v826 = vpack.c.bf16 %v821, %v821
    %827 = vmatprep.subr.bf16.mxu0 %v649
    %828 = vmatpush1.bf16.msra.mxu0 %v648
    %829 = vmatprep.subr.bf16.mxu0 %v653
    %830 = vmatpush1.bf16.msra.mxu0 %v652
    %831 = vmatprep.subr.bf16.mxu0 %v657
    %832 = vmatpush1.bf16.msra.mxu0 %v656
    %833 = vmatprep.subr.bf16.mxu0 %v661
    %834 = vmatpush1.bf16.msra.mxu0 %v660
    %835 = vmatprep.subr.bf16.mxu0 %v665
    %836 = vmatpush1.bf16.msra.mxu0 %v664
    %837 = vmatprep.subr.bf16.mxu0 %v669
    %838 = vmatpush1.bf16.msra.mxu0 %v668
    %839 = vmatprep.subr.bf16.mxu0 %v673
    %840 = vmatpush1.bf16.msra.mxu0 %v672
    %841 = vmatprep.subr.bf16.mxu0 %v677
    %842 = vmatpush1.bf16.msra.mxu0 %v676
    %843 = vmatprep.subr.bf16.mxu0 0
    %844 = vmatpush1.bf16.msra.mxu0 0
    %845 = vmatprep.subr.bf16.mxu0 0
    %846 = vmatpush1.bf16.msra.mxu0 0
    %847 = vmatprep.subr.bf16.mxu0 0
    %848 = vmatpush1.bf16.msra.mxu0 0
    %849 = vmatprep.subr.bf16.mxu0 0
    %850 = vmatpush1.bf16.msra.mxu0 0
    %851 = vmatprep.subr.bf16.mxu0 0
    %852 = vmatpush1.bf16.msra.mxu0 0
    %853 = vmatprep.subr.bf16.mxu0 0
    %854 = vmatpush1.bf16.msra.mxu0 0
    %855 = vmatprep.subr.bf16.mxu0 0
    %856 = vmatpush1.bf16.msra.mxu0 0
    %857 = vmatprep.subr.bf16.mxu0 0
    %858 = vmatpush1.bf16.msra.mxu0 0
    %859 = vmatprep.mubr.bf16.mxu0 0
    %860 = vmatmul.mubr.bf16.gmra.mrb[0].mxu0 %v826
    %v861 = vpop.f32.mrb[0].mxu0
    %v862 = vadd.f32 0.0, %v861
    %v863 = vpop.f32.mrb[0].mxu0
    %v864 = vadd.f32 0.0, %v863
    %v865 = vpop.f32.mrb[0].mxu0
    %v866 = vpop.f32.mrb[0].mxu0
    %867 = vdwg.mxu0
    %868 = vmatprep.subr.bf16.mxu0 %v651
    %869 = vmatpush1.bf16.msra.mxu0 %v650
    %870 = vmatprep.subr.bf16.mxu0 %v655
    %871 = vmatpush1.bf16.msra.mxu0 %v654
    %872 = vmatprep.subr.bf16.mxu0 %v659
    %873 = vmatpush1.bf16.msra.mxu0 %v658
    %874 = vmatprep.subr.bf16.mxu0 %v663
    %875 = vmatpush1.bf16.msra.mxu0 %v662
    %876 = vmatprep.subr.bf16.mxu0 %v667
    %877 = vmatpush1.bf16.msra.mxu0 %v666
    %878 = vmatprep.subr.bf16.mxu0 %v671
    %879 = vmatpush1.bf16.msra.mxu0 %v670
    %880 = vmatprep.subr.bf16.mxu0 %v675
    %881 = vmatpush1.bf16.msra.mxu0 %v674
    %882 = vmatprep.subr.bf16.mxu0 %v679
    %883 = vmatpush1.bf16.msra.mxu0 %v678
    %884 = vmatprep.subr.bf16.mxu0 0
    %885 = vmatpush1.bf16.msra.mxu0 0
    %886 = vmatprep.subr.bf16.mxu0 0
    %887 = vmatpush1.bf16.msra.mxu0 0
    %888 = vmatprep.subr.bf16.mxu0 0
    %889 = vmatpush1.bf16.msra.mxu0 0
    %890 = vmatprep.subr.bf16.mxu0 0
    %891 = vmatpush1.bf16.msra.mxu0 0
    %892 = vmatprep.subr.bf16.mxu0 0
    %893 = vmatpush1.bf16.msra.mxu0 0
    %894 = vmatprep.subr.bf16.mxu0 0
    %895 = vmatpush1.bf16.msra.mxu0 0
    %896 = vmatprep.subr.bf16.mxu0 0
    %897 = vmatpush1.bf16.msra.mxu0 0
    %898 = vmatprep.subr.bf16.mxu0 0
    %899 = vmatpush1.bf16.msra.mxu0 0
    %900 = vmatprep.mubr.bf16.mxu0 0
    %901 = vmatmul.mubr.bf16.gmra.mrb[0].mxu0 %v826
    %v902 = vpop.f32.mrb[0].mxu0
    %v903 = vadd.f32 0.0, %v902
    %v904 = vpop.f32.mrb[0].mxu0
    %v905 = vadd.f32 0.0, %v904
    %v906 = vpop.f32.mrb[0].mxu0
    %v907 = vpop.f32.mrb[0].mxu0
    %908 = vdwg.mxu0
    %v909 = vadd.f32 %v822, %v862
    %v910 = vadd.f32 %v823, %v864
    %v911 = vadd.f32 %v824, %v903
    %v912 = vadd.f32 %v825, %v905
    %v913 = vxor.u32 %v909, 2147483648
    %v914 = vmul.f32 %v913, 1.442695
    %v915 = vpow.pop %v914
    %v916 = vadd.f32 %v915, 1.0
    %v917 = vrcp.pop %v916
    %v918 = vmul.f32 1.0, %v917
    %v919 = vxor.u32 %v910, 2147483648
    %v920 = vmul.f32 %v919, 1.442695
    %v921 = vpow.pop %v920
    %v922 = vadd.f32 %v921, 1.0
    %v923 = vrcp.pop %v922
    %v924 = vmul.f32 1.0, %v923
    %v925 = vtanh.pop %v911
    %v926 = vxor.u32 %v912, 2147483648
    %v927 = vmul.f32 %v926, 1.442695
    %v928 = vpow.pop %v927
    %v929 = vadd.f32 %v928, 1.0
    %v930 = vrcp.pop %v929
    %v931 = vmul.f32 1.0, %v930
    %v932 = vmul.f32 %v924, %v819
    %v933 = vmul.f32 %v918, %v925
    %v934 = vadd.f32 %v932, %v933
    %v935 = vtanh.pop %v934
    %v936 = vmul.f32 %v931, %v935
    %v937 = vld [vmem:[#allocation2 + $0x40] sm:$0xff]
    %v938 = vld [vmem:[#allocation2 + $0x48] sm:$0xff]
    %v939 = vld [vmem:[#allocation2 + $0x50] sm:$0xff]
    %v940 = vld [vmem:[#allocation2 + $0x58] sm:$0xff]
    %v941 = vpack.c.bf16 %v936, %v936
    %942 = vmatprep.subr.bf16.mxu0 %v649
    %943 = vmatpush1.bf16.msra.mxu0 %v648
    %944 = vmatprep.subr.bf16.mxu0 %v653
    %945 = vmatpush1.bf16.msra.mxu0 %v652
    %946 = vmatprep.subr.bf16.mxu0 %v657
    %947 = vmatpush1.bf16.msra.mxu0 %v656
    %948 = vmatprep.subr.bf16.mxu0 %v661
    %949 = vmatpush1.bf16.msra.mxu0 %v660
    %950 = vmatprep.subr.bf16.mxu0 %v665
    %951 = vmatpush1.bf16.msra.mxu0 %v664
    %952 = vmatprep.subr.bf16.mxu0 %v669
    %953 = vmatpush1.bf16.msra.mxu0 %v668
    %954 = vmatprep.subr.bf16.mxu0 %v673
    %955 = vmatpush1.bf16.msra.mxu0 %v672
    %956 = vmatprep.subr.bf16.mxu0 %v677
    %957 = vmatpush1.bf16.msra.mxu0 %v676
    %958 = vmatprep.subr.bf16.mxu0 0
    %959 = vmatpush1.bf16.msra.mxu0 0
    %960 = vmatprep.subr.bf16.mxu0 0
    %961 = vmatpush1.bf16.msra.mxu0 0
    %962 = vmatprep.subr.bf16.mxu0 0
    %963 = vmatpush1.bf16.msra.mxu0 0
    %964 = vmatprep.subr.bf16.mxu0 0
    %965 = vmatpush1.bf16.msra.mxu0 0
    %966 = vmatprep.subr.bf16.mxu0 0
    %967 = vmatpush1.bf16.msra.mxu0 0
    %968 = vmatprep.subr.bf16.mxu0 0
    %969 = vmatpush1.bf16.msra.mxu0 0
    %970 = vmatprep.subr.bf16.mxu0 0
    %971 = vmatpush1.bf16.msra.mxu0 0
    %972 = vmatprep.subr.bf16.mxu0 0
    %973 = vmatpush1.bf16.msra.mxu0 0
    %974 = vmatprep.mubr.bf16.mxu0 0
    %975 = vmatmul.mubr.bf16.gmra.mrb[0].mxu0 %v941
    %v976 = vpop.f32.mrb[0].mxu0
    %v977 = vadd.f32 0.0, %v976
    %v978 = vpop.f32.mrb[0].mxu0
    %v979 = vadd.f32 0.0, %v978
    %v980 = vpop.f32.mrb[0].mxu0
    %v981 = vpop.f32.mrb[0].mxu0
    %982 = vdwg.mxu0
    %983 = vmatprep.subr.bf16.mxu0 %v651
    %984 = vmatpush1.bf16.msra.mxu0 %v650
    %985 = vmatprep.subr.bf16.mxu0 %v655
    %986 = vmatpush1.bf16.msra.mxu0 %v654
    %987 = vmatprep.subr.bf16.mxu0 %v659
    %988 = vmatpush1.bf16.msra.mxu0 %v658
    %989 = vmatprep.subr.bf16.mxu0 %v663
    %990 = vmatpush1.bf16.msra.mxu0 %v662
    %991 = vmatprep.subr.bf16.mxu0 %v667
    %992 = vmatpush1.bf16.msra.mxu0 %v666
    %993 = vmatprep.subr.bf16.mxu0 %v671
    %994 = vmatpush1.bf16.msra.mxu0 %v670
    %995 = vmatprep.subr.bf16.mxu0 %v675
    %996 = vmatpush1.bf16.msra.mxu0 %v674
    %997 = vmatprep.subr.bf16.mxu0 %v679
    %998 = vmatpush1.bf16.msra.mxu0 %v678
    %999 = vmatprep.subr.bf16.mxu0 0
    %1000 = vmatpush1.bf16.msra.mxu0 0
    %1001 = vmatprep.subr.bf16.mxu0 0
    %1002 = vmatpush1.bf16.msra.mxu0 0
    %1003 = vmatprep.subr.bf16.mxu0 0
    %1004 = vmatpush1.bf16.msra.mxu0 0
    %1005 = vmatprep.subr.bf16.mxu0 0
    %1006 = vmatpush1.bf16.msra.mxu0 0
    %1007 = vmatprep.subr.bf16.mxu0 0
    %1008 = vmatpush1.bf16.msra.mxu0 0
    %1009 = vmatprep.subr.bf16.mxu0 0
    %1010 = vmatpush1.bf16.msra.mxu0 0
    %1011 = vmatprep.subr.bf16.mxu0 0
    %1012 = vmatpush1.bf16.msra.mxu0 0
    %1013 = vmatprep.subr.bf16.mxu0 0
    %1014 = vmatpush1.bf16.msra.mxu0 0
    %1015 = vmatprep.mubr.bf16.mxu0 0
    %1016 = vmatmul.mubr.bf16.gmra.mrb[0].mxu0 %v941
    %v1017 = vpop.f32.mrb[0].mxu0
    %v1018 = vadd.f32 0.0, %v1017
    %v1019 = vpop.f32.mrb[0].mxu0
    %v1020 = vadd.f32 0.0, %v1019
    %v1021 = vpop.f32.mrb[0].mxu0
    %v1022 = vpop.f32.mrb[0].mxu0
    %1023 = vdwg.mxu0
    %v1024 = vadd.f32 %v937, %v977
    %v1025 = vadd.f32 %v938, %v979
    %v1026 = vadd.f32 %v939, %v1018
    %v1027 = vadd.f32 %v940, %v1020
    %v1028 = vxor.u32 %v1024, 2147483648
    %v1029 = vmul.f32 %v1028, 1.442695
    %v1030 = vpow.pop %v1029
    %v1031 = vadd.f32 %v1030, 1.0
    %v1032 = vrcp.pop %v1031
    %v1033 = vmul.f32 1.0, %v1032
    %v1034 = vxor.u32 %v1025, 2147483648
    %v1035 = vmul.f32 %v1034, 1.442695
    %v1036 = vpow.pop %v1035
    %v1037 = vadd.f32 %v1036, 1.0
    %v1038 = vrcp.pop %v1037
    %v1039 = vmul.f32 1.0, %v1038
    %v1040 = vtanh.pop %v1026
    %v1041 = vxor.u32 %v1027, 2147483648
    %v1042 = vmul.f32 %v1041, 1.442695
    %v1043 = vpow.pop %v1042
    %v1044 = vadd.f32 %v1043, 1.0
    %v1045 = vrcp.pop %v1044
    %v1046 = vmul.f32 1.0, %v1045
    %v1047 = vmul.f32 %v1039, %v934
    %v1048 = vmul.f32 %v1033, %v1040
    %v1049 = vadd.f32 %v1047, %v1048
    %v1050 = vtanh.pop %v1049
    %v1051 = vmul.f32 %v1046, %v1050
    %v1052 = vld [vmem:[#allocation2 + $0x60] sm:$0xff]
    %v1053 = vld [vmem:[#allocation2 + $0x68] sm:$0xff]
    %v1054 = vld [vmem:[#allocation2 + $0x70] sm:$0xff]
    %v1055 = vld [vmem:[#allocation2 + $0x78] sm:$0xff]
    %v1056 = vpack.c.bf16 %v1051, %v1051
    %1057 = vmatprep.subr.bf16.mxu0 %v649
    %1058 = vmatpush1.bf16.msra.mxu0 %v648
    %1059 = vmatprep.subr.bf16.mxu0 %v653
    %1060 = vmatpush1.bf16.msra.mxu0 %v652
    %1061 = vmatprep.subr.bf16.mxu0 %v657
    %1062 = vmatpush1.bf16.msra.mxu0 %v656
    %1063 = vmatprep.subr.bf16.mxu0 %v661
    %1064 = vmatpush1.bf16.msra.mxu0 %v660
    %1065 = vmatprep.subr.bf16.mxu0 %v665
    %1066 = vmatpush1.bf16.msra.mxu0 %v664
    %1067 = vmatprep.subr.bf16.mxu0 %v669
    %1068 = vmatpush1.bf16.msra.mxu0 %v668
    %1069 = vmatprep.subr.bf16.mxu0 %v673
    %1070 = vmatpush1.bf16.msra.mxu0 %v672
    %1071 = vmatprep.subr.bf16.mxu0 %v677
    %1072 = vmatpush1.bf16.msra.mxu0 %v676
    %1073 = vmatprep.subr.bf16.mxu0 0
    %1074 = vmatpush1.bf16.msra.mxu0 0
    %1075 = vmatprep.subr.bf16.mxu0 0
    %1076 = vmatpush1.bf16.msra.mxu0 0
    %1077 = vmatprep.subr.bf16.mxu0 0
    %1078 = vmatpush1.bf16.msra.mxu0 0
    %1079 = vmatprep.subr.bf16.mxu0 0
    %1080 = vmatpush1.bf16.msra.mxu0 0
    %1081 = vmatprep.subr.bf16.mxu0 0
    %1082 = vmatpush1.bf16.msra.mxu0 0
    %1083 = vmatprep.subr.bf16.mxu0 0
    %1084 = vmatpush1.bf16.msra.mxu0 0
    %1085 = vmatprep.subr.bf16.mxu0 0
    %1086 = vmatpush1.bf16.msra.mxu0 0
    %1087 = vmatprep.subr.bf16.mxu0 0
    %1088 = vmatpush1.bf16.msra.mxu0 0
    %1089 = vmatprep.mubr.bf16.mxu0 0
    %1090 = vmatmul.mubr.bf16.gmra.mrb[0].mxu0 %v1056
    %v1091 = vpop.f32.mrb[0].mxu0
    %v1092 = vadd.f32 0.0, %v1091
    %v1093 = vpop.f32.mrb[0].mxu0
    %v1094 = vadd.f32 0.0, %v1093
    %v1095 = vpop.f32.mrb[0].mxu0
    %v1096 = vpop.f32.mrb[0].mxu0
    %1097 = vdwg.mxu0
    %1098 = vmatprep.subr.bf16.mxu0 %v651
    %1099 = vmatpush1.bf16.msra.mxu0 %v650
    %1100 = vmatprep.subr.bf16.mxu0 %v655
    %1101 = vmatpush1.bf16.msra.mxu0 %v654
    %1102 = vmatprep.subr.bf16.mxu0 %v659
    %1103 = vmatpush1.bf16.msra.mxu0 %v658
    %1104 = vmatprep.subr.bf16.mxu0 %v663
    %1105 = vmatpush1.bf16.msra.mxu0 %v662
    %1106 = vmatprep.subr.bf16.mxu0 %v667
    %1107 = vmatpush1.bf16.msra.mxu0 %v666
    %1108 = vmatprep.subr.bf16.mxu0 %v671
    %1109 = vmatpush1.bf16.msra.mxu0 %v670
    %1110 = vmatprep.subr.bf16.mxu0 %v675
    %1111 = vmatpush1.bf16.msra.mxu0 %v674
    %1112 = vmatprep.subr.bf16.mxu0 %v679
    %1113 = vmatpush1.bf16.msra.mxu0 %v678
    %1114 = vmatprep.subr.bf16.mxu0 0
    %1115 = vmatpush1.bf16.msra.mxu0 0
    %1116 = vmatprep.subr.bf16.mxu0 0
    %1117 = vmatpush1.bf16.msra.mxu0 0
    %1118 = vmatprep.subr.bf16.mxu0 0
    %1119 = vmatpush1.bf16.msra.mxu0 0
    %1120 = vmatprep.subr.bf16.mxu0 0
    %1121 = vmatpush1.bf16.msra.mxu0 0
    %1122 = vmatprep.subr.bf16.mxu0 0
    %1123 = vmatpush1.bf16.msra.mxu0 0
    %1124 = vmatprep.subr.bf16.mxu0 0
    %1125 = vmatpush1.bf16.msra.mxu0 0
    %1126 = vmatprep.subr.bf16.mxu0 0
    %1127 = vmatpush1.bf16.msra.mxu0 0
    %1128 = vmatprep.subr.bf16.mxu0 0
    %1129 = vmatpush1.bf16.msra.mxu0 0
    %1130 = vmatprep.mubr.bf16.mxu0 0
    %1131 = vmatmul.mubr.bf16.gmra.mrb[0].mxu0 %v1056
    %v1132 = vpop.f32.mrb[0].mxu0
    %v1133 = vadd.f32 0.0, %v1132
    %v1134 = vpop.f32.mrb[0].mxu0
    %v1135 = vadd.f32 0.0, %v1134
    %v1136 = vpop.f32.mrb[0].mxu0
    %v1137 = vpop.f32.mrb[0].mxu0
    %1138 = vdwg.mxu0
    %v1139 = vadd.f32 %v1052, %v1092
    %v1140 = vadd.f32 %v1053, %v1094
    %v1141 = vadd.f32 %v1054, %v1133
    %v1142 = vadd.f32 %v1055, %v1135
    %v1143 = vxor.u32 %v1139, 2147483648
    %v1144 = vmul.f32 %v1143, 1.442695
    %v1145 = vpow.pop %v1144
    %v1146 = vadd.f32 %v1145, 1.0
    %v1147 = vrcp.pop %v1146
    %v1148 = vmul.f32 1.0, %v1147
    %v1149 = vxor.u32 %v1140, 2147483648
    %v1150 = vmul.f32 %v1149, 1.442695
    %v1151 = vpow.pop %v1150
    %v1152 = vadd.f32 %v1151, 1.0
    %v1153 = vrcp.pop %v1152
    %v1154 = vmul.f32 1.0, %v1153
    %v1155 = vtanh.pop %v1141
    %v1156 = vxor.u32 %v1142, 2147483648
    %v1157 = vmul.f32 %v1156, 1.442695
    %v1158 = vpow.pop %v1157
    %v1159 = vadd.f32 %v1158, 1.0
    %v1160 = vrcp.pop %v1159
    %v1161 = vmul.f32 1.0, %v1160
    %v1162 = vmul.f32 %v1154, %v1049
    %v1163 = vmul.f32 %v1148, %v1155
    %v1164 = vadd.f32 %v1162, %v1163
    %v1165 = vtanh.pop %v1164
    %v1166 = vmul.f32 %v1161, %v1165
    %v1167 = vld [vmem:[#allocation2 + $0x80] sm:$0xff]
    %v1168 = vld [vmem:[#allocation2 + $0x88] sm:$0xff]
    %v1169 = vld [vmem:[#allocation2 + $0x90] sm:$0xff]
    %v1170 = vld [vmem:[#allocation2 + $0x98] sm:$0xff]
    %v1171 = vpack.c.bf16 %v1166, %v1166
    %1172 = vmatprep.subr.bf16.mxu0 %v649
    %1173 = vmatpush1.bf16.msra.mxu0 %v648
    %1174 = vmatprep.subr.bf16.mxu0 %v653
    %1175 = vmatpush1.bf16.msra.mxu0 %v652
    %1176 = vmatprep.subr.bf16.mxu0 %v657
    %1177 = vmatpush1.bf16.msra.mxu0 %v656
    %1178 = vmatprep.subr.bf16.mxu0 %v661
    %1179 = vmatpush1.bf16.msra.mxu0 %v660
    %1180 = vmatprep.subr.bf16.mxu0 %v665
    %1181 = vmatpush1.bf16.msra.mxu0 %v664
    %1182 = vmatprep.subr.bf16.mxu0 %v669
    %1183 = vmatpush1.bf16.msra.mxu0 %v668
    %1184 = vmatprep.subr.bf16.mxu0 %v673
    %1185 = vmatpush1.bf16.msra.mxu0 %v672
    %1186 = vmatprep.subr.bf16.mxu0 %v677
    %1187 = vmatpush1.bf16.msra.mxu0 %v676
    %1188 = vmatprep.subr.bf16.mxu0 0
    %1189 = vmatpush1.bf16.msra.mxu0 0
    %1190 = vmatprep.subr.bf16.mxu0 0
    %1191 = vmatpush1.bf16.msra.mxu0 0
    %1192 = vmatprep.subr.bf16.mxu0 0
    %1193 = vmatpush1.bf16.msra.mxu0 0
    %1194 = vmatprep.subr.bf16.mxu0 0
    %1195 = vmatpush1.bf16.msra.mxu0 0
    %1196 = vmatprep.subr.bf16.mxu0 0
    %1197 = vmatpush1.bf16.msra.mxu0 0
    %1198 = vmatprep.subr.bf16.mxu0 0
    %1199 = vmatpush1.bf16.msra.mxu0 0
    %1200 = vmatprep.subr.bf16.mxu0 0
    %1201 = vmatpush1.bf16.msra.mxu0 0
    %1202 = vmatprep.subr.bf16.mxu0 0
    %1203 = vmatpush1.bf16.msra.mxu0 0
    %1204 = vmatprep.mubr.bf16.mxu0 0
    %1205 = vmatmul.mubr.bf16.gmra.mrb[0].mxu0 %v1171
    %v1206 = vpop.f32.mrb[0].mxu0
    %v1207 = vadd.f32 0.0, %v1206
    %v1208 = vpop.f32.mrb[0].mxu0
    %v1209 = vadd.f32 0.0, %v1208
    %v1210 = vpop.f32.mrb[0].mxu0
    %v1211 = vpop.f32.mrb[0].mxu0
    %1212 = vdwg.mxu0
    %1213 = vmatprep.subr.bf16.mxu0 %v651
    %1214 = vmatpush1.bf16.msra.mxu0 %v650
    %1215 = vmatprep.subr.bf16.mxu0 %v655
    %1216 = vmatpush1.bf16.msra.mxu0 %v654
    %1217 = vmatprep.subr.bf16.mxu0 %v659
    %1218 = vmatpush1.bf16.msra.mxu0 %v658
    %1219 = vmatprep.subr.bf16.mxu0 %v663
    %1220 = vmatpush1.bf16.msra.mxu0 %v662
    %1221 = vmatprep.subr.bf16.mxu0 %v667
    %1222 = vmatpush1.bf16.msra.mxu0 %v666
    %1223 = vmatprep.subr.bf16.mxu0 %v671
    %1224 = vmatpush1.bf16.msra.mxu0 %v670
    %1225 = vmatprep.subr.bf16.mxu0 %v675
    %1226 = vmatpush1.bf16.msra.mxu0 %v674
    %1227 = vmatprep.subr.bf16.mxu0 %v679
    %1228 = vmatpush1.bf16.msra.mxu0 %v678
    %1229 = vmatprep.subr.bf16.mxu0 0
    %1230 = vmatpush1.bf16.msra.mxu0 0
    %1231 = vmatprep.subr.bf16.mxu0 0
    %1232 = vmatpush1.bf16.msra.mxu0 0
    %1233 = vmatprep.subr.bf16.mxu0 0
    %1234 = vmatpush1.bf16.msra.mxu0 0
    %1235 = vmatprep.subr.bf16.mxu0 0
    %1236 = vmatpush1.bf16.msra.mxu0 0
    %1237 = vmatprep.subr.bf16.mxu0 0
    %1238 = vmatpush1.bf16.msra.mxu0 0
    %1239 = vmatprep.subr.bf16.mxu0 0
    %1240 = vmatpush1.bf16.msra.mxu0 0
    %1241 = vmatprep.subr.bf16.mxu0 0
    %1242 = vmatpush1.bf16.msra.mxu0 0
    %1243 = vmatprep.subr.bf16.mxu0 0
    %1244 = vmatpush1.bf16.msra.mxu0 0
    %1245 = vmatprep.mubr.bf16.mxu0 0
    %1246 = vmatmul.mubr.bf16.gmra.mrb[0].mxu0 %v1171
    %v1247 = vpop.f32.mrb[0].mxu0
    %v1248 = vadd.f32 0.0, %v1247
    %v1249 = vpop.f32.mrb[0].mxu0
    %v1250 = vadd.f32 0.0, %v1249
    %v1251 = vpop.f32.mrb[0].mxu0
    %v1252 = vpop.f32.mrb[0].mxu0
    %1253 = vdwg.mxu0
    %v1254 = vadd.f32 %v1167, %v1207
    %v1255 = vadd.f32 %v1168, %v1209
    %v1256 = vadd.f32 %v1169, %v1248
    %v1257 = vadd.f32 %v1170, %v1250
    %v1258 = vxor.u32 %v1254, 2147483648
    %v1259 = vmul.f32 %v1258, 1.442695
    %v1260 = vpow.pop %v1259
    %v1261 = vadd.f32 %v1260, 1.0
    %v1262 = vrcp.pop %v1261
    %v1263 = vmul.f32 1.0, %v1262
    %v1264 = vxor.u32 %v1255, 2147483648
    %v1265 = vmul.f32 %v1264, 1.442695
    %v1266 = vpow.pop %v1265
    %v1267 = vadd.f32 %v1266, 1.0
    %v1268 = vrcp.pop %v1267
    %v1269 = vmul.f32 1.0, %v1268
    %v1270 = vtanh.pop %v1256
    %v1271 = vxor.u32 %v1257, 2147483648
    %v1272 = vmul.f32 %v1271, 1.442695
    %v1273 = vpow.pop %v1272
    %v1274 = vadd.f32 %v1273, 1.0
    %v1275 = vrcp.pop %v1274
    %v1276 = vmul.f32 1.0, %v1275
    %v1277 = vmul.f32 %v1269, %v1164
    %v1278 = vmul.f32 %v1263, %v1270
    %v1279 = vadd.f32 %v1277, %v1278
    %v1280 = vtanh.pop %v1279
    %v1281 = vmul.f32 %v1276, %v1280
    %v1282 = vld [vmem:[#allocation2 + $0xa0] sm:$0xff]
    %v1283 = vld [vmem:[#allocation2 + $0xa8] sm:$0xff]
    %v1284 = vld [vmem:[#allocation2 + $0xb0] sm:$0xff]
    %v1285 = vld [vmem:[#allocation2 + $0xb8] sm:$0xff]
    %v1286 = vpack.c.bf16 %v1281, %v1281
    %1287 = vmatprep.subr.bf16.mxu0 %v649
    %1288 = vmatpush1.bf16.msra.mxu0 %v648
    %1289 = vmatprep.subr.bf16.mxu0 %v653
    %1290 = vmatpush1.bf16.msra.mxu0 %v652
    %1291 = vmatprep.subr.bf16.mxu0 %v657
    %1292 = vmatpush1.bf16.msra.mxu0 %v656
    %1293 = vmatprep.subr.bf16.mxu0 %v661
    %1294 = vmatpush1.bf16.msra.mxu0 %v660
    %1295 = vmatprep.subr.bf16.mxu0 %v665
    %1296 = vmatpush1.bf16.msra.mxu0 %v664
    %1297 = vmatprep.subr.bf16.mxu0 %v669
    %1298 = vmatpush1.bf16.msra.mxu0 %v668
    %1299 = vmatprep.subr.bf16.mxu0 %v673
    %1300 = vmatpush1.bf16.msra.mxu0 %v672
    %1301 = vmatprep.subr.bf16.mxu0 %v677
    %1302 = vmatpush1.bf16.msra.mxu0 %v676
    %1303 = vmatprep.subr.bf16.mxu0 0
    %1304 = vmatpush1.bf16.msra.mxu0 0
    %1305 = vmatprep.subr.bf16.mxu0 0
    %1306 = vmatpush1.bf16.msra.mxu0 0
    %1307 = vmatprep.subr.bf16.mxu0 0
    %1308 = vmatpush1.bf16.msra.mxu0 0
    %1309 = vmatprep.subr.bf16.mxu0 0
    %1310 = vmatpush1.bf16.msra.mxu0 0
    %1311 = vmatprep.subr.bf16.mxu0 0
    %1312 = vmatpush1.bf16.msra.mxu0 0
    %1313 = vmatprep.subr.bf16.mxu0 0
    %1314 = vmatpush1.bf16.msra.mxu0 0
    %1315 = vmatprep.subr.bf16.mxu0 0
    %1316 = vmatpush1.bf16.msra.mxu0 0
    %1317 = vmatprep.subr.bf16.mxu0 0
    %1318 = vmatpush1.bf16.msra.mxu0 0
    %1319 = vmatprep.mubr.bf16.mxu0 0
    %1320 = vmatmul.mubr.bf16.gmra.mrb[0].mxu0 %v1286
    %v1321 = vpop.f32.mrb[0].mxu0
    %v1322 = vadd.f32 0.0, %v1321
    %v1323 = vpop.f32.mrb[0].mxu0
    %v1324 = vadd.f32 0.0, %v1323
    %v1325 = vpop.f32.mrb[0].mxu0
    %v1326 = vpop.f32.mrb[0].mxu0
    %1327 = vdwg.mxu0
    %1328 = vmatprep.subr.bf16.mxu0 %v651
    %1329 = vmatpush1.bf16.msra.mxu0 %v650
    %1330 = vmatprep.subr.bf16.mxu0 %v655
    %1331 = vmatpush1.bf16.msra.mxu0 %v654
    %1332 = vmatprep.subr.bf16.mxu0 %v659
    %1333 = vmatpush1.bf16.msra.mxu0 %v658
    %1334 = vmatprep.subr.bf16.mxu0 %v663
    %1335 = vmatpush1.bf16.msra.mxu0 %v662
    %1336 = vmatprep.subr.bf16.mxu0 %v667
    %1337 = vmatpush1.bf16.msra.mxu0 %v666
    %1338 = vmatprep.subr.bf16.mxu0 %v671
    %1339 = vmatpush1.bf16.msra.mxu0 %v670
    %1340 = vmatprep.subr.bf16.mxu0 %v675
    %1341 = vmatpush1.bf16.msra.mxu0 %v674
    %1342 = vmatprep.subr.bf16.mxu0 %v679
    %1343 = vmatpush1.bf16.msra.mxu0 %v678
    %1344 = vmatprep.subr.bf16.mxu0 0
    %1345 = vmatpush1.bf16.msra.mxu0 0
    %1346 = vmatprep.subr.bf16.mxu0 0
    %1347 = vmatpush1.bf16.msra.mxu0 0
    %1348 = vmatprep.subr.bf16.mxu0 0
    %1349 = vmatpush1.bf16.msra.mxu0 0
    %1350 = vmatprep.subr.bf16.mxu0 0
    %1351 = vmatpush1.bf16.msra.mxu0 0
    %1352 = vmatprep.subr.bf16.mxu0 0
    %1353 = vmatpush1.bf16.msra.mxu0 0
    %1354 = vmatprep.subr.bf16.mxu0 0
    %1355 = vmatpush1.bf16.msra.mxu0 0
    %1356 = vmatprep.subr.bf16.mxu0 0
    %1357 = vmatpush1.bf16.msra.mxu0 0
    %1358 = vmatprep.subr.bf16.mxu0 0
    %1359 = vmatpush1.bf16.msra.mxu0 0
    %1360 = vmatprep.mubr.bf16.mxu0 0
    %1361 = vmatmul.mubr.bf16.gmra.mrb[0].mxu0 %v1286
    %v1362 = vpop.f32.mrb[0].mxu0
    %v1363 = vadd.f32 0.0, %v1362
    %v1364 = vpop.f32.mrb[0].mxu0
    %v1365 = vadd.f32 0.0, %v1364
    %v1366 = vpop.f32.mrb[0].mxu0
    %v1367 = vpop.f32.mrb[0].mxu0
    %1368 = vdwg.mxu0
    %v1369 = vadd.f32 %v1282, %v1322
    %v1370 = vadd.f32 %v1283, %v1324
    %v1371 = vadd.f32 %v1284, %v1363
    %v1372 = vadd.f32 %v1285, %v1365
    %v1373 = vxor.u32 %v1369, 2147483648
    %v1374 = vmul.f32 %v1373, 1.442695
    %v1375 = vpow.pop %v1374
    %v1376 = vadd.f32 %v1375, 1.0
    %v1377 = vrcp.pop %v1376
    %v1378 = vmul.f32 1.0, %v1377
    %v1379 = vxor.u32 %v1370, 2147483648
    %v1380 = vmul.f32 %v1379, 1.442695
    %v1381 = vpow.pop %v1380
    %v1382 = vadd.f32 %v1381, 1.0
    %v1383 = vrcp.pop %v1382
    %v1384 = vmul.f32 1.0, %v1383
    %v1385 = vtanh.pop %v1371
    %v1386 = vxor.u32 %v1372, 2147483648
    %v1387 = vmul.f32 %v1386, 1.442695
    %v1388 = vpow.pop %v1387
    %v1389 = vadd.f32 %v1388, 1.0
    %v1390 = vrcp.pop %v1389
    %v1391 = vmul.f32 1.0, %v1390
    %v1392 = vmul.f32 %v1384, %v1279
    %v1393 = vmul.f32 %v1378, %v1385
    %v1394 = vadd.f32 %v1392, %v1393
    %v1395 = vtanh.pop %v1394
    %v1396 = vmul.f32 %v1391, %v1395
    %v1397 = vld [vmem:[#allocation2 + $0xc0] sm:$0xff]
    %v1398 = vld [vmem:[#allocation2 + $0xc8] sm:$0xff]
    %v1399 = vld [vmem:[#allocation2 + $0xd0] sm:$0xff]
    %v1400 = vld [vmem:[#allocation2 + $0xd8] sm:$0xff]
    %v1401 = vpack.c.bf16 %v1396, %v1396
    %1402 = vmatprep.subr.bf16.mxu0 %v649
    %1403 = vmatpush1.bf16.msra.mxu0 %v648
    %1404 = vmatprep.subr.bf16.mxu0 %v653
    %1405 = vmatpush1.bf16.msra.mxu0 %v652
    %1406 = vmatprep.subr.bf16.mxu0 %v657
    %1407 = vmatpush1.bf16.msra.mxu0 %v656
    %1408 = vmatprep.subr.bf16.mxu0 %v661
    %1409 = vmatpush1.bf16.msra.mxu0 %v660
    %1410 = vmatprep.subr.bf16.mxu0 %v665
    %1411 = vmatpush1.bf16.msra.mxu0 %v664
    %1412 = vmatprep.subr.bf16.mxu0 %v669
    %1413 = vmatpush1.bf16.msra.mxu0 %v668
    %1414 = vmatprep.subr.bf16.mxu0 %v673
    %1415 = vmatpush1.bf16.msra.mxu0 %v672
    %1416 = vmatprep.subr.bf16.mxu0 %v677
    %1417 = vmatpush1.bf16.msra.mxu0 %v676
    %1418 = vmatprep.subr.bf16.mxu0 0
    %1419 = vmatpush1.bf16.msra.mxu0 0
    %1420 = vmatprep.subr.bf16.mxu0 0
    %1421 = vmatpush1.bf16.msra.mxu0 0
    %1422 = vmatprep.subr.bf16.mxu0 0
    %1423 = vmatpush1.bf16.msra.mxu0 0
    %1424 = vmatprep.subr.bf16.mxu0 0
    %1425 = vmatpush1.bf16.msra.mxu0 0
    %1426 = vmatprep.subr.bf16.mxu0 0
    %1427 = vmatpush1.bf16.msra.mxu0 0
    %1428 = vmatprep.subr.bf16.mxu0 0
    %1429 = vmatpush1.bf16.msra.mxu0 0
    %1430 = vmatprep.subr.bf16.mxu0 0
    %1431 = vmatpush1.bf16.msra.mxu0 0
    %1432 = vmatprep.subr.bf16.mxu0 0
    %1433 = vmatpush1.bf16.msra.mxu0 0
    %1434 = vmatprep.mubr.bf16.mxu0 0
    %1435 = vmatmul.mubr.bf16.gmra.mrb[0].mxu0 %v1401
    %v1436 = vpop.f32.mrb[0].mxu0
    %v1437 = vadd.f32 0.0, %v1436
    %v1438 = vpop.f32.mrb[0].mxu0
    %v1439 = vadd.f32 0.0, %v1438
    %v1440 = vpop.f32.mrb[0].mxu0
    %v1441 = vpop.f32.mrb[0].mxu0
    %1442 = vdwg.mxu0
    %1443 = vmatprep.subr.bf16.mxu0 %v651
    %1444 = vmatpush1.bf16.msra.mxu0 %v650
    %1445 = vmatprep.subr.bf16.mxu0 %v655
    %1446 = vmatpush1.bf16.msra.mxu0 %v654
    %1447 = vmatprep.subr.bf16.mxu0 %v659
    %1448 = vmatpush1.bf16.msra.mxu0 %v658
    %1449 = vmatprep.subr.bf16.mxu0 %v663
    %1450 = vmatpush1.bf16.msra.mxu0 %v662
    %1451 = vmatprep.subr.bf16.mxu0 %v667
    %1452 = vmatpush1.bf16.msra.mxu0 %v666
    %1453 = vmatprep.subr.bf16.mxu0 %v671
    %1454 = vmatpush1.bf16.msra.mxu0 %v670
    %1455 = vmatprep.subr.bf16.mxu0 %v675
    %1456 = vmatpush1.bf16.msra.mxu0 %v674
    %1457 = vmatprep.subr.bf16.mxu0 %v679
    %1458 = vmatpush1.bf16.msra.mxu0 %v678
    %1459 = vmatprep.subr.bf16.mxu0 0
    %1460 = vmatpush1.bf16.msra.mxu0 0
    %1461 = vmatprep.subr.bf16.mxu0 0
    %1462 = vmatpush1.bf16.msra.mxu0 0
    %1463 = vmatprep.subr.bf16.mxu0 0
    %1464 = vmatpush1.bf16.msra.mxu0 0
    %1465 = vmatprep.subr.bf16.mxu0 0
    %1466 = vmatpush1.bf16.msra.mxu0 0
    %1467 = vmatprep.subr.bf16.mxu0 0
    %1468 = vmatpush1.bf16.msra.mxu0 0
    %1469 = vmatprep.subr.bf16.mxu0 0
    %1470 = vmatpush1.bf16.msra.mxu0 0
    %1471 = vmatprep.subr.bf16.mxu0 0
    %1472 = vmatpush1.bf16.msra.mxu0 0
    %1473 = vmatprep.subr.bf16.mxu0 0
    %1474 = vmatpush1.bf16.msra.mxu0 0
    %1475 = vmatprep.mubr.bf16.mxu0 0
    %1476 = vmatmul.mubr.bf16.gmra.mrb[0].mxu0 %v1401
    %v1477 = vpop.f32.mrb[0].mxu0
    %v1478 = vadd.f32 0.0, %v1477
    %v1479 = vpop.f32.mrb[0].mxu0
    %v1480 = vadd.f32 0.0, %v1479
    %v1481 = vpop.f32.mrb[0].mxu0
    %v1482 = vpop.f32.mrb[0].mxu0
    %1483 = vdwg.mxu0
    %v1484 = vadd.f32 %v1397, %v1437
    %v1485 = vadd.f32 %v1398, %v1439
    %v1486 = vadd.f32 %v1399, %v1478
    %v1487 = vadd.f32 %v1400, %v1480
    %v1488 = vxor.u32 %v1484, 2147483648
    %v1489 = vmul.f32 %v1488, 1.442695
    %v1490 = vpow.pop %v1489
    %v1491 = vadd.f32 %v1490, 1.0
    %v1492 = vrcp.pop %v1491
    %v1493 = vmul.f32 1.0, %v1492
    %v1494 = vxor.u32 %v1485, 2147483648
    %v1495 = vmul.f32 %v1494, 1.442695
    %v1496 = vpow.pop %v1495
    %v1497 = vadd.f32 %v1496, 1.0
    %v1498 = vrcp.pop %v1497
    %v1499 = vmul.f32 1.0, %v1498
    %v1500 = vtanh.pop %v1486
    %v1501 = vxor.u32 %v1487, 2147483648
    %v1502 = vmul.f32 %v1501, 1.442695
    %v1503 = vpow.pop %v1502
    %v1504 = vadd.f32 %v1503, 1.0
    %v1505 = vrcp.pop %v1504
    %v1506 = vmul.f32 1.0, %v1505
    %v1507 = vmul.f32 %v1499, %v1394
    %v1508 = vmul.f32 %v1493, %v1500
    %v1509 = vadd.f32 %v1507, %v1508
    %v1510 = vtanh.pop %v1509
    %v1511 = vmul.f32 %v1506, %v1510
    %v1512 = vld [vmem:[#allocation2 + $0xe0] sm:$0xff]
    %v1513 = vld [vmem:[#allocation2 + $0xe8] sm:$0xff]
    %v1514 = vld [vmem:[#allocation2 + $0xf0] sm:$0xff]
    %v1515 = vld [vmem:[#allocation2 + $0xf8] sm:$0xff]
    %v1516 = vpack.c.bf16 %v1511, %v1511
    %1517 = vmatprep.subr.bf16.mxu0 %v649
    %1518 = vmatpush1.bf16.msra.mxu0 %v648
    %1519 = vmatprep.subr.bf16.mxu0 %v653
    %1520 = vmatpush1.bf16.msra.mxu0 %v652
    %1521 = vmatprep.subr.bf16.mxu0 %v657
    %1522 = vmatpush1.bf16.msra.mxu0 %v656
    %1523 = vmatprep.subr.bf16.mxu0 %v661
    %1524 = vmatpush1.bf16.msra.mxu0 %v660
    %1525 = vmatprep.subr.bf16.mxu0 %v665
    %1526 = vmatpush1.bf16.msra.mxu0 %v664
    %1527 = vmatprep.subr.bf16.mxu0 %v669
    %1528 = vmatpush1.bf16.msra.mxu0 %v668
    %1529 = vmatprep.subr.bf16.mxu0 %v673
    %1530 = vmatpush1.bf16.msra.mxu0 %v672
    %1531 = vmatprep.subr.bf16.mxu0 %v677
    %1532 = vmatpush1.bf16.msra.mxu0 %v676
    %1533 = vmatprep.subr.bf16.mxu0 0
    %1534 = vmatpush1.bf16.msra.mxu0 0
    %1535 = vmatprep.subr.bf16.mxu0 0
    %1536 = vmatpush1.bf16.msra.mxu0 0
    %1537 = vmatprep.subr.bf16.mxu0 0
    %1538 = vmatpush1.bf16.msra.mxu0 0
    %1539 = vmatprep.subr.bf16.mxu0 0
    %1540 = vmatpush1.bf16.msra.mxu0 0
    %1541 = vmatprep.subr.bf16.mxu0 0
    %1542 = vmatpush1.bf16.msra.mxu0 0
    %1543 = vmatprep.subr.bf16.mxu0 0
    %1544 = vmatpush1.bf16.msra.mxu0 0
    %1545 = vmatprep.subr.bf16.mxu0 0
    %1546 = vmatpush1.bf16.msra.mxu0 0
    %1547 = vmatprep.subr.bf16.mxu0 0
    %1548 = vmatpush1.bf16.msra.mxu0 0
    %1549 = vmatprep.mubr.bf16.mxu0 0
    %1550 = vmatmul.mubr.bf16.gmra.mrb[0].mxu0 %v1516
    %v1551 = vpop.f32.mrb[0].mxu0
    %v1552 = vadd.f32 0.0, %v1551
    %v1553 = vpop.f32.mrb[0].mxu0
    %v1554 = vadd.f32 0.0, %v1553
    %v1555 = vpop.f32.mrb[0].mxu0
    %v1556 = vpop.f32.mrb[0].mxu0
    %1557 = vdwg.mxu0
    %1558 = vmatprep.subr.bf16.mxu0 %v651
    %1559 = vmatpush1.bf16.msra.mxu0 %v650
    %1560 = vmatprep.subr.bf16.mxu0 %v655
    %1561 = vmatpush1.bf16.msra.mxu0 %v654
    %1562 = vmatprep.subr.bf16.mxu0 %v659
    %1563 = vmatpush1.bf16.msra.mxu0 %v658
    %1564 = vmatprep.subr.bf16.mxu0 %v663
    %1565 = vmatpush1.bf16.msra.mxu0 %v662
    %1566 = vmatprep.subr.bf16.mxu0 %v667
    %1567 = vmatpush1.bf16.msra.mxu0 %v666
    %1568 = vmatprep.subr.bf16.mxu0 %v671
    %1569 = vmatpush1.bf16.msra.mxu0 %v670
    %1570 = vmatprep.subr.bf16.mxu0 %v675
    %1571 = vmatpush1.bf16.msra.mxu0 %v674
    %1572 = vmatprep.subr.bf16.mxu0 %v679
    %1573 = vmatpush1.bf16.msra.mxu0 %v678
    %1574 = vmatprep.subr.bf16.mxu0 0
    %1575 = vmatpush1.bf16.msra.mxu0 0
    %1576 = vmatprep.subr.bf16.mxu0 0
    %1577 = vmatpush1.bf16.msra.mxu0 0
    %1578 = vmatprep.subr.bf16.mxu0 0
    %1579 = vmatpush1.bf16.msra.mxu0 0
    %1580 = vmatprep.subr.bf16.mxu0 0
    %1581 = vmatpush1.bf16.msra.mxu0 0
    %1582 = vmatprep.subr.bf16.mxu0 0
    %1583 = vmatpush1.bf16.msra.mxu0 0
    %1584 = vmatprep.subr.bf16.mxu0 0
    %1585 = vmatpush1.bf16.msra.mxu0 0
    %1586 = vmatprep.subr.bf16.mxu0 0
    %1587 = vmatpush1.bf16.msra.mxu0 0
    %1588 = vmatprep.subr.bf16.mxu0 0
    %1589 = vmatpush1.bf16.msra.mxu0 0
    %1590 = vmatprep.mubr.bf16.mxu0 0
    %1591 = vmatmul.mubr.bf16.gmra.mrb[0].mxu0 %v1516
    %v1592 = vpop.f32.mrb[0].mxu0
    %v1593 = vadd.f32 0.0, %v1592
    %v1594 = vpop.f32.mrb[0].mxu0
    %v1595 = vadd.f32 0.0, %v1594
    %v1596 = vpop.f32.mrb[0].mxu0
    %v1597 = vpop.f32.mrb[0].mxu0
    %1598 = vdwg.mxu0
    %v1599 = vadd.f32 %v1512, %v1552
    %v1600 = vadd.f32 %v1513, %v1554
    %v1601 = vadd.f32 %v1514, %v1593
    %v1602 = vadd.f32 %v1515, %v1595
    %v1603 = vxor.u32 %v1599, 2147483648
    %v1604 = vmul.f32 %v1603, 1.442695
    %v1605 = vpow.pop %v1604
    %v1606 = vadd.f32 %v1605, 1.0
    %v1607 = vrcp.pop %v1606
    %v1608 = vmul.f32 1.0, %v1607
    %v1609 = vxor.u32 %v1600, 2147483648
    %v1610 = vmul.f32 %v1609, 1.442695
    %v1611 = vpow.pop %v1610
    %v1612 = vadd.f32 %v1611, 1.0
    %v1613 = vrcp.pop %v1612
    %v1614 = vmul.f32 1.0, %v1613
    %v1615 = vtanh.pop %v1601
    %v1616 = vxor.u32 %v1602, 2147483648
    %v1617 = vmul.f32 %v1616, 1.442695
    %v1618 = vpow.pop %v1617
    %v1619 = vadd.f32 %v1618, 1.0
    %v1620 = vrcp.pop %v1619
    %v1621 = vmul.f32 1.0, %v1620
    %v1622 = vmul.f32 %v1614, %v1509
    %v1623 = vmul.f32 %v1608, %v1615
    %v1624 = vadd.f32 %v1622, %v1623
    %v1625 = vtanh.pop %v1624
    %v1626 = vmul.f32 %v1621, %v1625
    %v1627 = vld [vmem:[#allocation12] sm:$0xff]
    %v1628 = vld [vmem:[#allocation12 + $0x8] sm:$0xff]
    %v1629 = vld [vmem:[#allocation12 + $0x10] sm:$0xff]
    %v1630 = vld [vmem:[#allocation12 + $0x18] sm:$0xff]
    %v1631 = vld [vmem:[#allocation12 + $0x20] sm:$0xff]
    %v1632 = vld [vmem:[#allocation12 + $0x28] sm:$0xff]
    %v1633 = vld [vmem:[#allocation12 + $0x30] sm:$0xff]
    %v1634 = vld [vmem:[#allocation12 + $0x38] sm:$0xff]
    %v1635 = vld [vmem:[#allocation12 + $0x40] sm:$0xff]
    %v1636 = vld [vmem:[#allocation12 + $0x48] sm:$0xff]
    %v1637 = vld [vmem:[#allocation12 + $0x50] sm:$0xff]
    %v1638 = vld [vmem:[#allocation12 + $0x58] sm:$0xff]
    %v1639 = vld [vmem:[#allocation12 + $0x60] sm:$0xff]
    %v1640 = vld [vmem:[#allocation12 + $0x68] sm:$0xff]
    %v1641 = vld [vmem:[#allocation12 + $0x70] sm:$0xff]
    %v1642 = vld [vmem:[#allocation12 + $0x78] sm:$0xff]
    %s1643 = sld [smem:[#allocation3]]
    %v1644 = vstv %s1643
    %1645 = vmatprep.subr.mxu0 0.0
    %1646 = vmatpush1.msra.mxu0 %v1627
    %1647 = vmatprep.subr.mxu0 0.0
    %1648 = vmatpush1.msra.mxu0 %v1628
    %1649 = vmatprep.subr.mxu0 0.0
    %1650 = vmatpush1.msra.mxu0 %v1629
    %1651 = vmatprep.subr.mxu0 0.0
    %1652 = vmatpush1.msra.mxu0 %v1630
    %1653 = vmatprep.subr.mxu0 0.0
    %1654 = vmatpush1.msra.mxu0 %v1631
    %1655 = vmatprep.subr.mxu0 0.0
    %1656 = vmatpush1.msra.mxu0 %v1632
    %1657 = vmatprep.subr.mxu0 0.0
    %1658 = vmatpush1.msra.mxu0 %v1633
    %1659 = vmatprep.subr.mxu0 0.0
    %1660 = vmatpush1.msra.mxu0 %v1634
    %1661 = vmatprep.subr.mxu0 0.0
    %1662 = vmatpush1.msra.mxu0 %v1635
    %1663 = vmatprep.subr.mxu0 0.0
    %1664 = vmatpush1.msra.mxu0 %v1636
    %1665 = vmatprep.subr.mxu0 0.0
    %1666 = vmatpush1.msra.mxu0 %v1637
    %1667 = vmatprep.subr.mxu0 0.0
    %1668 = vmatpush1.msra.mxu0 %v1638
    %1669 = vmatprep.subr.mxu0 0.0
    %1670 = vmatpush1.msra.mxu0 %v1639
    %1671 = vmatprep.subr.mxu0 0.0
    %1672 = vmatpush1.msra.mxu0 %v1640
    %1673 = vmatprep.subr.mxu0 0.0
    %1674 = vmatpush1.msra.mxu0 %v1641
    %1675 = vmatprep.subr.mxu0 0.0
    %1676 = vmatpush1.msra.mxu0 %v1642
    %1677 = vmatprep.subr.mxu0 0.0
    %1678 = vmatpush1.msra.mxu0 0.0
    %1679 = vmatprep.subr.mxu0 0.0
    %1680 = vmatpush1.msra.mxu0 0.0
    %1681 = vmatprep.subr.mxu0 0.0
    %1682 = vmatpush1.msra.mxu0 0.0
    %1683 = vmatprep.subr.mxu0 0.0
    %1684 = vmatpush1.msra.mxu0 0.0
    %1685 = vmatprep.subr.mxu0 0.0
    %1686 = vmatpush1.msra.mxu0 0.0
    %1687 = vmatprep.subr.mxu0 0.0
    %1688 = vmatpush1.msra.mxu0 0.0
    %1689 = vmatprep.subr.mxu0 0.0
    %1690 = vmatpush1.msra.mxu0 0.0
    %1691 = vmatprep.subr.mxu0 0.0
    %1692 = vmatpush1.msra.mxu0 0.0
    %1693 = vmatprep.subr.mxu0 0.0
    %1694 = vmatpush1.msra.mxu0 0.0
    %1695 = vmatprep.subr.mxu0 0.0
    %1696 = vmatpush1.msra.mxu0 0.0
    %1697 = vmatprep.subr.mxu0 0.0
    %1698 = vmatpush1.msra.mxu0 0.0
    %1699 = vmatprep.subr.mxu0 0.0
    %1700 = vmatpush1.msra.mxu0 0.0
    %1701 = vmatprep.subr.mxu0 0.0
    %1702 = vmatpush1.msra.mxu0 0.0
    %1703 = vmatprep.subr.mxu0 0.0
    %1704 = vmatpush1.msra.mxu0 0.0
    %1705 = vmatprep.subr.mxu0 0.0
    %1706 = vmatpush1.msra.mxu0 0.0
    %1707 = vmatprep.subr.mxu0 0.0
    %1708 = vmatpush1.msra.mxu0 0.0
    %1709 = vmatprep.mubr.f32.mxu0 0.0
    %1710 = vmatmul.mubr.f32.gmra.mrb[0].mxu0 %v1626
    %v1711 = vpop.f32.mrb[0].mxu0
    %v1712 = vadd.f32 %v1644, %v1711
    %v1713 = vpop.f32.mrb[0].mxu0
    %1714 = vdwg.mxu0
    %v1715 = vxor.u32 %v1712, 2147483648
    %v1716 = vmul.f32 %v1715, 1.442695
    %v1717 = vpow.pop %v1716
    %v1718 = vadd.f32 %v1717, 1.0
    %v1719 = vrcp.pop %v1718
    %v1720 = vmul.f32 1.0, %v1719
    %1721 = vst [vmem:[#allocation13] sm:$0xff] %v1720
    // Predicated region
    $region46: #{lstm_model_forward.1} parent=1 // pred_check
      _
    $region47: #{lstm_model_forward.1} parent=1 // pred_check_branch
      %1723 = sbr.rel (0) target = $region49
    $region48: #{lstm_model_forward.1} parent=1 // pred_region
      %s1725 = ssub.s32 128, 128
      %1726 = vsyncadd [#allocation6], %s1725
      %s1728 = sshll.u32 [#allocation13], 4
      %s1729 = int_to_ptr.vmem [resolvable:$true] %s1728
      %1731 = dma.vmem_to_hbm [thread:$0]  %s1729, 128, %s6, [#allocation6]
    $region49: #{lstm_model_forward.1} parent=1 // pred_fallthru
      _
    // Predicated region
    $region50: #{lstm_model_forward.1} parent=1 // pred_check
      _
    $region51: #{lstm_model_forward.1} parent=1 // pred_check_branch
      %1733 = sbr.rel (0) target = $region53
    $region52: #{lstm_model_forward.1} parent=1 // pred_region
      %1734 = dma.done [#allocation6], 128
    $region53: #{lstm_model_forward.1} parent=1 // pred_fallthru
      _
    %1735 = vsyncpa [#allocation5], 1
    %1736 = vsyncpa [#allocation8], 1
    %1737 = vsyncpa [#allocation11], 1
    %1738 = vsyncpa [#allocation6], 1

</llo_original>
